<compile_context>
chip_gen: v7x
topology: tpu7x:2x2x1
jax: 0.10.0
libtpu: 0.0.40
codegen_flags: <defaults>
</compile_context>

<pallas_src>
import functools
import math

import jax
import jax.numpy as jnp
import numpy as np
from jax.experimental import pallas as pl
from jax.experimental.pallas import tpu as pltpu

# ---------------- configuration (small, deterministic) ----------------
BATCH = 2
SEQ = 8
HIDDEN = 32
NUM_HEADS = 4
HEAD_DIM = HIDDEN // NUM_HEADS
LN_EPS = 1e-12          # RoBERTa default layer_norm_eps


# ---------------- Pallas kernel (one batch element per grid step) ----------------
def _attention_kernel(x_ref, mask_ref, wqkv_ref, bqkv_ref, wo_ref, bo_ref,
                      gamma_ref, beta_ref, out_ref,
                      *, seq, hidden, num_heads, head_dim, eps):
    x = x_ref[...]                                    # (S, H) f32
    x_t = x.T                                         # (H, S) f32 (2-D minor transpose)

    # ---- fused Q/K/V projection: ONE (3H, H) @ (H, S) MXU matmul, f32 acc ----
    qkv_t = jnp.dot(wqkv_ref[...], x_t.astype(jnp.bfloat16),
                    preferred_element_type=jnp.float32) + bqkv_ref[...]   # (3H, S)

    # Per-head split = regrouping the major (feature) axis -> free relayout.
    qkv_h = qkv_t.reshape(3 * num_heads, head_dim, seq)   # (3nH, d, S)
    q_t = qkv_h[:num_heads]                               # (nH, d, S)
    k_t = qkv_h[num_heads:2 * num_heads]                  # (nH, d, S)
    v_t = qkv_h[2 * num_heads:]                           # (nH, d, S)

    # Only q needs a (batched, last-two-dims) transpose to reach the canonical
    # batched-matmul orientation.
    q_h = jnp.swapaxes(q_t, 1, 2)                          # (nH, S, d)

    # ---- scaled dot-product attention, batched over the leading head axis ----
    scale = 1.0 / math.sqrt(head_dim)
    scores = jnp.einsum("hqd,hdk->hqk",
                        q_h.astype(jnp.bfloat16), k_t.astype(jnp.bfloat16),
                        preferred_element_type=jnp.float32) * scale       # (nH, S, S)
    scores = scores + mask_ref[...][None, :, :]            # HF additive key mask (1,1,S)

    # numerically-stable softmax in f32; reciprocal goes to the EUP slot.
    scores = scores - jnp.max(scores, axis=-1, keepdims=True)
    p = jnp.exp(scores)
    probs = p * pl.reciprocal(jnp.sum(p, axis=-1, keepdims=True), approx=False)

    # ctx^T per head: contraction on the last dim of both operands (canonical).
    ctx_t = jnp.einsum("hdk,hqk->hdq",
                       v_t.astype(jnp.bfloat16), probs.astype(jnp.bfloat16),
                       preferred_element_type=jnp.float32)                # (nH, d, S)

    # concat(heads)^T = regroup of the major axis -> (H, S), free relayout.
    ctx2_t = ctx_t.reshape(hidden, seq)

    # ---- output projection: ONE K=H matmul  Wo @ concat(heads)^T ----
    attn_t = jnp.dot(wo_ref[...], ctx2_t.astype(jnp.bfloat16),
                     preferred_element_type=jnp.float32) + bo_ref[...]    # (H, S)

    # ---- residual + LayerNorm (f32, biased variance, eps inside sqrt) ----
    y = (attn_t + x_t).T                                   # back to (S, H)
    mu = jnp.mean(y, axis=-1, keepdims=True)
    var = jnp.mean((y - mu) ** 2, axis=-1, keepdims=True)
    y = (y - mu) * jax.lax.rsqrt(var + eps)
    # TODO(synk): a lane-dense (>=128-wide) output slab only pays once S*H grows.
    out_ref[...] = y * gamma_ref[...] + beta_ref[...]


# ---------------- wrapper ----------------
def pack_params(params):
    """One-time wrapper-side packing.  Weights stay in torch nn.Linear layout
    (out_features, in_features); QKV is fused along the out-feature axis and the
    MXU operands are pre-cast to bfloat16 (accumulation stays f32 in-kernel)."""
    h = HIDDEN
    wqkv = jnp.concatenate([params["wq"], params["wk"], params["wv"]],
                           axis=0).astype(jnp.bfloat16)          # (3H, H)
    bqkv = jnp.concatenate([params["bq"], params["bk"], params["bv"]],
                           axis=0).reshape(3 * h, 1)              # (3H, 1) f32
    return {
        "wqkv": wqkv,
        "bqkv": bqkv,
        "wo": params["wo"].astype(jnp.bfloat16),                  # (H, H)
        "bo": params["bo"].reshape(h, 1),                         # (H, 1)
        "gamma": params["gamma"].reshape(1, h),
        "beta": params["beta"].reshape(1, h),
    }


def alt_roberta_attention(hidden_states, attention_mask, packed):
    """hidden_states: (B, S, H) f32; attention_mask: (B, 1, S) HF additive f32."""
    B, S, H = hidden_states.shape
    kernel = functools.partial(_attention_kernel, seq=S, hidden=H,
                               num_heads=NUM_HEADS, head_dim=HEAD_DIM, eps=LN_EPS)

    in_specs = [
        pl.BlockSpec((None, S, H), lambda b: (b, 0, 0)),     # hidden_states
        pl.BlockSpec((None, 1, S), lambda b: (b, 0, 0)),     # attention_mask (per-batch)
        pl.BlockSpec((3 * H, H), lambda b: (0, 0)),          # Wqkv (bf16), resident
        pl.BlockSpec((3 * H, 1), lambda b: (0, 0)),          # bqkv
        pl.BlockSpec((H, H), lambda b: (0, 0)),              # Wo   (bf16), resident
        pl.BlockSpec((H, 1), lambda b: (0, 0)),              # bo
        pl.BlockSpec((1, H), lambda b: (0, 0)),              # gamma
        pl.BlockSpec((1, H), lambda b: (0, 0)),              # beta
    ]
    out = pl.pallas_call(
        kernel,
        out_shape=jax.ShapeDtypeStruct((B, S, H), jnp.float32),
        grid=(B,),
        in_specs=in_specs,
        out_specs=pl.BlockSpec((None, S, H), lambda b: (b, 0, 0)),
        compiler_params=pltpu.CompilerParams(
            dimension_semantics=("parallel",)),
    )(hidden_states, attention_mask, packed["wqkv"], packed["bqkv"],
      packed["wo"], packed["bo"], packed["gamma"], packed["beta"])
    return out


# ---------------- pure-JAX reference (sanity check, all f32) ----------------
def reference(hidden_states, attention_mask, params):
    x = hidden_states
    B, S, H = x.shape
    q = x @ params["wq"].T + params["bq"]
    k = x @ params["wk"].T + params["bk"]
    v = x @ params["wv"].T + params["bv"]

    def split(t):  # (B, S, H) -> (B, nH, S, d)
        return t.reshape(B, S, NUM_HEADS, HEAD_DIM).transpose(0, 2, 1, 3)

    qh, kh, vh = split(q), split(k), split(v)
    scores = jnp.einsum("bhld,bhrd->bhlr", qh, kh) / math.sqrt(HEAD_DIM)
    scores = scores + attention_mask[:, None, :, :]          # (B,1,1,S)
    probs = jax.nn.softmax(scores, axis=-1)
    ctx = jnp.einsum("bhlr,bhrd->bhld", probs, vh)
    ctx = ctx.transpose(0, 2, 1, 3).reshape(B, S, H)
    out = ctx @ params["wo"].T + params["bo"]
    y = out + x
    mu = jnp.mean(y, axis=-1, keepdims=True)
    var = jnp.mean((y - mu) ** 2, axis=-1, keepdims=True)
    yn = (y - mu) / jnp.sqrt(var + LN_EPS)
    return yn * params["gamma"] + params["beta"]


# ---------------- main ----------------
if __name__ == "__main__":
    key = jax.random.PRNGKey(0)
    keys = jax.random.split(key, 10)

    def lin_init(kw, shape, fan_in):
        bound = 1.0 / math.sqrt(fan_in)
        return jax.random.uniform(kw, shape, jnp.float32, -bound, bound)

    params = {
        "wq": lin_init(keys[0], (HIDDEN, HIDDEN), HIDDEN),
        "bq": lin_init(keys[1], (HIDDEN,), HIDDEN),
        "wk": lin_init(keys[2], (HIDDEN, HIDDEN), HIDDEN),
        "bk": lin_init(keys[3], (HIDDEN,), HIDDEN),
        "wv": lin_init(keys[4], (HIDDEN, HIDDEN), HIDDEN),
        "bv": lin_init(keys[5], (HIDDEN,), HIDDEN),
        "wo": lin_init(keys[6], (HIDDEN, HIDDEN), HIDDEN),
        "bo": lin_init(keys[7], (HIDDEN,), HIDDEN),
        "gamma": jnp.ones((HIDDEN,), jnp.float32),
        "beta": jnp.zeros((HIDDEN,), jnp.float32),
    }

    hidden_states = jax.random.normal(keys[8], (BATCH, SEQ, HIDDEN), jnp.float32)

    # HF-style additive mask: 0 for attended positions, -10000 for masked.
    pad = jnp.arange(SEQ)[None, :] < jnp.array([SEQ, SEQ - 2])[:, None]
    attention_mask = jnp.where(pad, 0.0, -1e4).astype(jnp.float32)[:, None, :]

    packed = pack_params(params)
    out = alt_roberta_attention(hidden_states, attention_mask, packed)
    out = jax.block_until_ready(out)

    ref = reference(hidden_states, attention_mask, params)
    # Tolerance covers bfloat16 MXU operands (f32 accumulation); observed error
    # is ~2-3e-3 absolute on O(1) outputs.
    np.testing.assert_allclose(np.asarray(out), np.asarray(ref),
                               rtol=1e-2, atol=1e-2)

    print("KERNEL_OK")
</pallas_src>

<mosaic_0001>
module attributes {stable_mosaic.version = 11 : i64} {
  func.func @_attention_kernel(%arg0: i32, %arg1: memref<1x8x32xf32, #tpu.memory_space<vmem>>, %arg2: memref<1x1x8xf32, #tpu.memory_space<vmem>>, %arg3: memref<96x32xbf16, #tpu.memory_space<vmem>>, %arg4: memref<96x1xf32, #tpu.memory_space<vmem>>, %arg5: memref<32x32xbf16, #tpu.memory_space<vmem>>, %arg6: memref<32x1xf32, #tpu.memory_space<vmem>>, %arg7: memref<1x32xf32, #tpu.memory_space<vmem>>, %arg8: memref<1x32xf32, #tpu.memory_space<vmem>>, %arg9: memref<1x8x32xf32, #tpu.memory_space<vmem>>) attributes {dimension_semantics = [#tpu.dimension_semantics<parallel>], iteration_bounds = array<i64: 2>, scalar_prefetch = 0 : i64, scratch_operands = 0 : i64, tpu.core_type = #tpu.core_type<tc>, window_params = [{transform_indices = @transform_0, window_bounds = array<i64: 1, 8, 32>}, {transform_indices = @transform_1, window_bounds = array<i64: 1, 1, 8>}, {pipeline_mode = #tpu.pipeline_mode<synchronous>, transform_indices = @transform_2, window_bounds = array<i64: 96, 32>}, {pipeline_mode = #tpu.pipeline_mode<synchronous>, transform_indices = @transform_3, window_bounds = array<i64: 96, 1>}, {pipeline_mode = #tpu.pipeline_mode<synchronous>, transform_indices = @transform_4, window_bounds = array<i64: 32, 32>}, {pipeline_mode = #tpu.pipeline_mode<synchronous>, transform_indices = @transform_5, window_bounds = array<i64: 32, 1>}, {pipeline_mode = #tpu.pipeline_mode<synchronous>, transform_indices = @transform_6, window_bounds = array<i64: 1, 32>}, {pipeline_mode = #tpu.pipeline_mode<synchronous>, transform_indices = @transform_7, window_bounds = array<i64: 1, 32>}, {transform_indices = @transform_8, window_bounds = array<i64: 1, 8, 32>}]} {
    %c0 = arith.constant 0 : index
    %c0_0 = arith.constant 0 : index
    %c0_1 = arith.constant 0 : index
    %0 = vector.load %arg1[%c0, %c0_0, %c0_1] : memref<1x8x32xf32, #tpu.memory_space<vmem>>, vector<1x8x32xf32>
    %1 = vector.shape_cast %0 : vector<1x8x32xf32> to vector<8x32xf32>
    %2 = tpu.transpose %1, [1, 0] : vector<8x32xf32> -> vector<32x8xf32>
    %c0_2 = arith.constant 0 : index
    %c0_3 = arith.constant 0 : index
    %3 = vector.load %arg3[%c0_2, %c0_3] : memref<96x32xbf16, #tpu.memory_space<vmem>>, vector<96x32xbf16>
    %4 = arith.truncf %2 : vector<32x8xf32> to vector<32x8xbf16>
    %cst = arith.constant dense<0.000000e+00> : vector<96x8xf32>
    %5 = tpu.matmul %3, %4, %cst {dimension_numbers = #tpu.dot_dimension_numbers<[1], [0], [0], [1], [0, 0, 1, 1], [], []>} : vector<96x32xbf16>, vector<32x8xbf16>, vector<96x8xf32> -> vector<96x8xf32>
    %c0_4 = arith.constant 0 : index
    %c0_5 = arith.constant 0 : index
    %6 = vector.load %arg4[%c0_4, %c0_5] : memref<96x1xf32, #tpu.memory_space<vmem>>, vector<96x1xf32>
    %7 = vector.broadcast %6 : vector<96x1xf32> to vector<96x8xf32>
    %8 = arith.addf %5, %7 : vector<96x8xf32>
    %9 = vector.shape_cast %8 : vector<96x8xf32> to vector<12x8x8xf32>
    %10 = vector.extract_strided_slice %9 {offsets = [0, 0, 0], sizes = [4, 8, 8], strides = [1, 1, 1]} : vector<12x8x8xf32> to vector<4x8x8xf32>
    %11 = vector.extract_strided_slice %9 {offsets = [4, 0, 0], sizes = [4, 8, 8], strides = [1, 1, 1]} : vector<12x8x8xf32> to vector<4x8x8xf32>
    %12 = vector.extract_strided_slice %9 {offsets = [8, 0, 0], sizes = [4, 8, 8], strides = [1, 1, 1]} : vector<12x8x8xf32> to vector<4x8x8xf32>
    %13 = tpu.transpose %10, [0, 2, 1] : vector<4x8x8xf32> -> vector<4x8x8xf32>
    %14 = arith.truncf %13 : vector<4x8x8xf32> to vector<4x8x8xbf16>
    %15 = arith.truncf %11 : vector<4x8x8xf32> to vector<4x8x8xbf16>
    "tpu.trace_start"() <{level = 10 : i32, message = "hqd,hdk->hqk"}> : () -> ()
    %cst_6 = arith.constant dense<0.000000e+00> : vector<4x8x8xf32>
    %16 = tpu.matmul %14, %15, %cst_6 {dimension_numbers = #tpu.dot_dimension_numbers<[2], [1], [1], [2], [0, 0, 0, 1, 1, 2], [0], [0]>} : vector<4x8x8xbf16>, vector<4x8x8xbf16>, vector<4x8x8xf32> -> vector<4x8x8xf32>
    "tpu.trace_stop"() : () -> ()
    %cst_7 = arith.constant 0.353553385 : f32
    %17 = vector.broadcast %cst_7 : f32 to vector<4x8x8xf32>
    %18 = arith.mulf %16, %17 : vector<4x8x8xf32>
    %c0_8 = arith.constant 0 : index
    %c0_9 = arith.constant 0 : index
    %c0_10 = arith.constant 0 : index
    %19 = vector.load %arg2[%c0_8, %c0_9, %c0_10] : memref<1x1x8xf32, #tpu.memory_space<vmem>>, vector<1x1x8xf32>
    %20 = vector.shape_cast %19 : vector<1x1x8xf32> to vector<1x8xf32>
    %21 = vector.shape_cast %20 : vector<1x8xf32> to vector<1x1x8xf32>
    %22 = vector.broadcast %21 : vector<1x1x8xf32> to vector<4x8x8xf32>
    %23 = arith.addf %18, %22 : vector<4x8x8xf32>
    %cst_11 = arith.constant dense<0xFF800000> : vector<4x8xf32>
    %24 = vector.multi_reduction <maximumf>, %23, %cst_11 [2] : vector<4x8x8xf32> to vector<4x8xf32>
    %25 = vector.shape_cast %24 : vector<4x8xf32> to vector<4x8x1xf32>
    %26 = vector.broadcast %25 : vector<4x8x1xf32> to vector<4x8x8xf32>
    %27 = arith.subf %23, %26 : vector<4x8x8xf32>
    %28 = math.exp %27 : vector<4x8x8xf32>
    %cst_12 = arith.constant dense<0.000000e+00> : vector<4x8xf32>
    %29 = vector.multi_reduction <add>, %28, %cst_12 [2] : vector<4x8x8xf32> to vector<4x8xf32>
    %30 = vector.shape_cast %29 : vector<4x8xf32> to vector<4x8x1xf32>
    %31 = tpu.reciprocal %30 : vector<4x8x1xf32> -> vector<4x8x1xf32>
    %32 = vector.broadcast %31 : vector<4x8x1xf32> to vector<4x8x8xf32>
    %33 = arith.mulf %28, %32 : vector<4x8x8xf32>
    %34 = arith.truncf %12 : vector<4x8x8xf32> to vector<4x8x8xbf16>
    %35 = arith.truncf %33 : vector<4x8x8xf32> to vector<4x8x8xbf16>
    "tpu.trace_start"() <{level = 10 : i32, message = "hdk,hqk->hdq"}> : () -> ()
    %cst_13 = arith.constant dense<0.000000e+00> : vector<4x8x8xf32>
    %36 = tpu.matmul %34, %35, %cst_13 {dimension_numbers = #tpu.dot_dimension_numbers<[2], [2], [1], [1], [0, 0, 0, 1, 1, 1], [0], [0]>} : vector<4x8x8xbf16>, vector<4x8x8xbf16>, vector<4x8x8xf32> -> vector<4x8x8xf32>
    "tpu.trace_stop"() : () -> ()
    %37 = vector.shape_cast %36 : vector<4x8x8xf32> to vector<32x8xf32>
    %c0_14 = arith.constant 0 : index
    %c0_15 = arith.constant 0 : index
    %38 = vector.load %arg5[%c0_14, %c0_15] : memref<32x32xbf16, #tpu.memory_space<vmem>>, vector<32x32xbf16>
    %39 = arith.truncf %37 : vector<32x8xf32> to vector<32x8xbf16>
    %cst_16 = arith.constant dense<0.000000e+00> : vector<32x8xf32>
    %40 = tpu.matmul %38, %39, %cst_16 {dimension_numbers = #tpu.dot_dimension_numbers<[1], [0], [0], [1], [0, 0, 1, 1], [], []>} : vector<32x32xbf16>, vector<32x8xbf16>, vector<32x8xf32> -> vector<32x8xf32>
    %c0_17 = arith.constant 0 : index
    %c0_18 = arith.constant 0 : index
    %41 = vector.load %arg6[%c0_17, %c0_18] : memref<32x1xf32, #tpu.memory_space<vmem>>, vector<32x1xf32>
    %42 = vector.broadcast %41 : vector<32x1xf32> to vector<32x8xf32>
    %43 = arith.addf %40, %42 : vector<32x8xf32>
    %44 = arith.addf %43, %2 : vector<32x8xf32>
    %45 = tpu.transpose %44, [1, 0] : vector<32x8xf32> -> vector<8x32xf32>
    %cst_19 = arith.constant dense<0.000000e+00> : vector<8xf32>
    %46 = vector.multi_reduction <add>, %45, %cst_19 [1] : vector<8x32xf32> to vector<8xf32>
    %47 = vector.shape_cast %46 : vector<8xf32> to vector<8x1xf32>
    %cst_20 = arith.constant 3.200000e+01 : f32
    %48 = vector.broadcast %cst_20 : f32 to vector<8x1xf32>
    %49 = arith.divf %47, %48 : vector<8x1xf32>
    %50 = vector.broadcast %49 : vector<8x1xf32> to vector<8x32xf32>
    %51 = arith.subf %45, %50 : vector<8x32xf32>
    %52 = arith.mulf %51, %51 : vector<8x32xf32>
    %cst_21 = arith.constant dense<0.000000e+00> : vector<8xf32>
    %53 = vector.multi_reduction <add>, %52, %cst_21 [1] : vector<8x32xf32> to vector<8xf32>
    %54 = vector.shape_cast %53 : vector<8xf32> to vector<8x1xf32>
    %cst_22 = arith.constant 3.200000e+01 : f32
    %55 = vector.broadcast %cst_22 : f32 to vector<8x1xf32>
    %56 = arith.divf %54, %55 : vector<8x1xf32>
    %57 = vector.broadcast %49 : vector<8x1xf32> to vector<8x32xf32>
    %58 = arith.subf %45, %57 : vector<8x32xf32>
    %cst_23 = arith.constant 9.99999996E-13 : f32
    %59 = vector.broadcast %cst_23 : f32 to vector<8x1xf32>
    %60 = arith.addf %56, %59 : vector<8x1xf32>
    %61 = math.rsqrt %60 : vector<8x1xf32>
    %62 = vector.broadcast %61 : vector<8x1xf32> to vector<8x32xf32>
    %63 = arith.mulf %58, %62 : vector<8x32xf32>
    %c0_24 = arith.constant 0 : index
    %c0_25 = arith.constant 0 : index
    %64 = vector.load %arg7[%c0_24, %c0_25] : memref<1x32xf32, #tpu.memory_space<vmem>>, vector<1x32xf32>
    %65 = vector.broadcast %64 : vector<1x32xf32> to vector<8x32xf32>
    %66 = arith.mulf %63, %65 : vector<8x32xf32>
    %c0_26 = arith.constant 0 : index
    %c0_27 = arith.constant 0 : index
    %67 = vector.load %arg8[%c0_26, %c0_27] : memref<1x32xf32, #tpu.memory_space<vmem>>, vector<1x32xf32>
    %68 = vector.broadcast %67 : vector<1x32xf32> to vector<8x32xf32>
    %69 = arith.addf %66, %68 : vector<8x32xf32>
    %c0_28 = arith.constant 0 : index
    %c0_29 = arith.constant 0 : index
    %c0_30 = arith.constant 0 : index
    %70 = vector.load %arg9[%c0_28, %c0_29, %c0_30] : memref<1x8x32xf32, #tpu.memory_space<vmem>>, vector<1x8x32xf32>
    %71 = vector.shape_cast %70 : vector<1x8x32xf32> to vector<8x32xf32>
    %72 = vector.shape_cast %69 : vector<8x32xf32> to vector<1x8x32xf32>
    tpu.vector_store %arg9[%c0_28, %c0_29, %c0_30], %72 {strides = array<i32>} : memref<1x8x32xf32, #tpu.memory_space<vmem>>, vector<1x8x32xf32>,
    return
  }
  func.func @transform_0(%arg0: i32) -> (i32, i32, i32) {
    %c0_i32 = arith.constant 0 : i32
    %c0_i32_0 = arith.constant 0 : i32
    %c0_i32_1 = arith.constant 0 : i32
    return %arg0, %c0_i32, %c0_i32_0 : i32, i32, i32
  }
  func.func @transform_1(%arg0: i32) -> (i32, i32, i32) {
    %c0_i32 = arith.constant 0 : i32
    %c0_i32_0 = arith.constant 0 : i32
    %c0_i32_1 = arith.constant 0 : i32
    return %arg0, %c0_i32, %c0_i32_0 : i32, i32, i32
  }
  func.func @transform_2(%arg0: i32) -> (i32, i32) {
    %c0_i32 = arith.constant 0 : i32
    %c0_i32_0 = arith.constant 0 : i32
    %c0_i32_1 = arith.constant 0 : i32
    return %c0_i32, %c0_i32_0 : i32, i32
  }
  func.func @transform_3(%arg0: i32) -> (i32, i32) {
    %c0_i32 = arith.constant 0 : i32
    %c0_i32_0 = arith.constant 0 : i32
    %c0_i32_1 = arith.constant 0 : i32
    return %c0_i32, %c0_i32_0 : i32, i32
  }
  func.func @transform_4(%arg0: i32) -> (i32, i32) {
    %c0_i32 = arith.constant 0 : i32
    %c0_i32_0 = arith.constant 0 : i32
    %c0_i32_1 = arith.constant 0 : i32
    return %c0_i32, %c0_i32_0 : i32, i32
  }
  func.func @transform_5(%arg0: i32) -> (i32, i32) {
    %c0_i32 = arith.constant 0 : i32
    %c0_i32_0 = arith.constant 0 : i32
    %c0_i32_1 = arith.constant 0 : i32
    return %c0_i32, %c0_i32_0 : i32, i32
  }
  func.func @transform_6(%arg0: i32) -> (i32, i32) {
    %c0_i32 = arith.constant 0 : i32
    %c0_i32_0 = arith.constant 0 : i32
    %c0_i32_1 = arith.constant 0 : i32
    return %c0_i32, %c0_i32_0 : i32, i32
  }
  func.func @transform_7(%arg0: i32) -> (i32, i32) {
    %c0_i32 = arith.constant 0 : i32
    %c0_i32_0 = arith.constant 0 : i32
    %c0_i32_1 = arith.constant 0 : i32
    return %c0_i32, %c0_i32_0 : i32, i32
  }
  func.func @transform_8(%arg0: i32) -> (i32, i32, i32) {
    %c0_i32 = arith.constant 0 : i32
    %c0_i32_0 = arith.constant 0 : i32
    %c0_i32_1 = arith.constant 0 : i32
    return %arg0, %c0_i32, %c0_i32_0 : i32, i32, i32
  }
}

</mosaic_0001>

<llo_original>
// kernel: tpu_custom_call.1
$region0: #{tpu_custom_call.1}
  #allocation0 [shape = 'u32[]', space=smem, size = 0x4, offset = 0x4, fixed_abs, tag = 'smem constant byte address 0x4 - core index']
  #allocation1 [shape = 'u32[144,128]{1,0:T(1,128)}', space=vmem, size = 0x12000, scoped, tag = 'internal scratch']
  %s0 = inlined_call_operand.vmem [shape: f32[2,8,32], index: 0, kind: input, shape index: {}]
  %s1 = inlined_call_operand.vmem [shape: f32[2,1,8], index: 1, kind: input, shape index: {}]
  %s2 = inlined_call_operand.vmem [shape: bf16[96,32], index: 2, kind: input, shape index: {}]
  %s3 = inlined_call_operand.vmem [shape: f32[96,1], index: 3, kind: input, shape index: {}]
  %s4 = inlined_call_operand.vmem [shape: bf16[32,32], index: 4, kind: input, shape index: {}]
  %s5 = inlined_call_operand.vmem [shape: f32[32,1], index: 5, kind: input, shape index: {}]
  %s6 = inlined_call_operand.vmem [shape: f32[1,32], index: 6, kind: input, shape index: {}]
  %s7 = inlined_call_operand.vmem [shape: f32[1,32], index: 7, kind: input, shape index: {}]
  %s8 = inlined_call_operand.hbm [shape: f32[2,8,32], index: 8, kind: output, shape index: {}]
  %s9 = sld [smem:[#allocation0]]
  $region65: #{tpu_custom_call.1} parent=0
    _
  %s11 = ssub.s32 1, %s9
  %s12 = scalar_select 0, %s11, %s9
  $region1: #{tpu_custom_call.1} parent=0
    #allocation2 [shape = 'u8[8192]{0}', space=vmem, size = 0x2000, scoped, tag = 'output window, operand 0']
    #allocation3 [shape = 's32[2]{0}', space=sflag, size = 0x8, scoped, tag = 'scoped memory for tpu_custom_call.1']
    %13 = vsyncpa [#allocation3], 0
    %s14 = scalar_lea.sflag [#allocation3], 1
    %15 = vsyncpa %s14, 0
    loop: start=0, step=1, limit=4
    $region2: #{tpu_custom_call.1} parent=1 // loop_pre_header
      _
    $region3: #{tpu_custom_call.1} parent=1 // loop_header
      %s17 = sphi 0, %s21
      %p18 = scmp.ge.s32.totalorder %s17, 4
      %s27 = sphi 0, %s29
      %s30 = sphi 0, %s27
      %s31 = sphi 0, %s30
      %s47 = sphi 0, %s31
      %s53 = sphi 0, %s55
      %s56 = sphi 0, %s53
      %s57 = sphi 0, %s56
      %s73 = sphi 0, %s57
      %s77 = sphi 0, %s77
      %s79 = sphi 0, %s77
      %s80 = sphi 0, %s79
      %s94 = sphi 0, %s80
      %s98 = sphi 0, %s98
      %s100 = sphi 0, %s98
      %s101 = sphi 0, %s100
      %s115 = sphi 0, %s101
      %s119 = sphi 0, %s119
      %s121 = sphi 0, %s119
      %s122 = sphi 0, %s121
      %s136 = sphi 0, %s122
      %s140 = sphi 0, %s140
      %s142 = sphi 0, %s140
      %s143 = sphi 0, %s142
      %s157 = sphi 0, %s143
      %s161 = sphi 0, %s161
      %s163 = sphi 0, %s161
      %s164 = sphi 0, %s163
      %s178 = sphi 0, %s164
      %s182 = sphi 0, %s182
      %s184 = sphi 0, %s182
      %s185 = sphi 0, %s184
      %s199 = sphi 0, %s185
      %s205 = sphi 0, %s207
      %s208 = sphi 0, %s205
      %s209 = sphi 0, %s208
      %s225 = sphi 0, %s209
    $region4: #{tpu_custom_call.1} parent=1 // loop_header_branch
      %20 = sbr.rel (%p18) target = $region8
    $region5: #{tpu_custom_call.1} parent=1 // loop_body
      %s22 = ssub.s32 %s17, 1
      %s23 = ssub.s32 %s17, 2
      %s24 = sadd.s32 %s17, 1
      %s25 = ssub.s32 %s17, %s24
      %p26 = scmp.eq.s32.totalorder %s25, 0
      %s28 = sadd.s32 %s27, 1
      %s29 = scalar_select %p26, %s27, %s28
      %p32 = pneg %p26
      %p33 = scmp.eq.s32.totalorder %s17, 1
      %p34 = por %p32, %p33
      %p35 = scmp.ne.s32.totalorder %s27, %s30
      %p36 = scmp.eq.s32.totalorder %s17, 0
      %p37 = por %p35, %p36
      %p38 = scmp.ne.s32.totalorder %s27, %s30
      %p39 = scmp.eq.s32.totalorder %s22, 1
      %p40 = por %p38, %p39
      %p41 = scmp.ne.s32.totalorder %s30, %s31
      %p42 = scmp.eq.s32.totalorder %s22, 0
      %p43 = por %p41, %p42
      %p44 = scmp.ne.s32.totalorder %s30, %s31
      %p45 = scmp.eq.s32.totalorder %s23, 1
      %p46 = por %p44, %p45
      %p48 = scmp.ne.s32.totalorder %s31, %s47
      %p49 = scmp.eq.s32.totalorder %s23, 0
      %p50 = por %p48, %p49
      %s51 = ssub.s32 %s17, %s24
      %p52 = scmp.eq.s32.totalorder %s51, 0
      %s54 = sadd.s32 %s53, 1
      %s55 = scalar_select %p52, %s53, %s54
      %p58 = pneg %p52
      %p59 = scmp.eq.s32.totalorder %s17, 1
      %p60 = por %p58, %p59
      %p61 = scmp.ne.s32.totalorder %s53, %s56
      %p62 = scmp.eq.s32.totalorder %s17, 0
      %p63 = por %p61, %p62
      %p64 = scmp.ne.s32.totalorder %s53, %s56
      %p65 = scmp.eq.s32.totalorder %s22, 1
      %p66 = por %p64, %p65
      %p67 = scmp.ne.s32.totalorder %s56, %s57
      %p68 = scmp.eq.s32.totalorder %s22, 0
      %p69 = por %p67, %p68
      %p70 = scmp.ne.s32.totalorder %s56, %s57
      %p71 = scmp.eq.s32.totalorder %s23, 1
      %p72 = por %p70, %p71
      %p74 = scmp.ne.s32.totalorder %s57, %s73
      %p75 = scmp.eq.s32.totalorder %s23, 0
      %p76 = por %p74, %p75
      %s78 = sadd.s32 %s77, 1
      %p81 = scmp.eq.s32.totalorder %s17, 1
      %p82 = scmp.ne.s32.totalorder %s77, %s79
      %p83 = scmp.eq.s32.totalorder %s17, 0
      %p84 = por %p82, %p83
      %p85 = scmp.ne.s32.totalorder %s77, %s79
      %p86 = scmp.eq.s32.totalorder %s22, 1
      %p87 = por %p85, %p86
      %p88 = scmp.ne.s32.totalorder %s79, %s80
      %p89 = scmp.eq.s32.totalorder %s22, 0
      %p90 = por %p88, %p89
      %p91 = scmp.ne.s32.totalorder %s79, %s80
      %p92 = scmp.eq.s32.totalorder %s23, 1
      %p93 = por %p91, %p92
      %p95 = scmp.ne.s32.totalorder %s80, %s94
      %p96 = scmp.eq.s32.totalorder %s23, 0
      %p97 = por %p95, %p96
      %s99 = sadd.s32 %s98, 1
      %p102 = scmp.eq.s32.totalorder %s17, 1
      %p103 = scmp.ne.s32.totalorder %s98, %s100
      %p104 = scmp.eq.s32.totalorder %s17, 0
      %p105 = por %p103, %p104
      %p106 = scmp.ne.s32.totalorder %s98, %s100
      %p107 = scmp.eq.s32.totalorder %s22, 1
      %p108 = por %p106, %p107
      %p109 = scmp.ne.s32.totalorder %s100, %s101
      %p110 = scmp.eq.s32.totalorder %s22, 0
      %p111 = por %p109, %p110
      %p112 = scmp.ne.s32.totalorder %s100, %s101
      %p113 = scmp.eq.s32.totalorder %s23, 1
      %p114 = por %p112, %p113
      %p116 = scmp.ne.s32.totalorder %s101, %s115
      %p117 = scmp.eq.s32.totalorder %s23, 0
      %p118 = por %p116, %p117
      %s120 = sadd.s32 %s119, 1
      %p123 = scmp.eq.s32.totalorder %s17, 1
      %p124 = scmp.ne.s32.totalorder %s119, %s121
      %p125 = scmp.eq.s32.totalorder %s17, 0
      %p126 = por %p124, %p125
      %p127 = scmp.ne.s32.totalorder %s119, %s121
      %p128 = scmp.eq.s32.totalorder %s22, 1
      %p129 = por %p127, %p128
      %p130 = scmp.ne.s32.totalorder %s121, %s122
      %p131 = scmp.eq.s32.totalorder %s22, 0
      %p132 = por %p130, %p131
      %p133 = scmp.ne.s32.totalorder %s121, %s122
      %p134 = scmp.eq.s32.totalorder %s23, 1
      %p135 = por %p133, %p134
      %p137 = scmp.ne.s32.totalorder %s122, %s136
      %p138 = scmp.eq.s32.totalorder %s23, 0
      %p139 = por %p137, %p138
      %s141 = sadd.s32 %s140, 1
      %p144 = scmp.eq.s32.totalorder %s17, 1
      %p145 = scmp.ne.s32.totalorder %s140, %s142
      %p146 = scmp.eq.s32.totalorder %s17, 0
      %p147 = por %p145, %p146
      %p148 = scmp.ne.s32.totalorder %s140, %s142
      %p149 = scmp.eq.s32.totalorder %s22, 1
      %p150 = por %p148, %p149
      %p151 = scmp.ne.s32.totalorder %s142, %s143
      %p152 = scmp.eq.s32.totalorder %s22, 0
      %p153 = por %p151, %p152
      %p154 = scmp.ne.s32.totalorder %s142, %s143
      %p155 = scmp.eq.s32.totalorder %s23, 1
      %p156 = por %p154, %p155
      %p158 = scmp.ne.s32.totalorder %s143, %s157
      %p159 = scmp.eq.s32.totalorder %s23, 0
      %p160 = por %p158, %p159
      %s162 = sadd.s32 %s161, 1
      %p165 = scmp.eq.s32.totalorder %s17, 1
      %p166 = scmp.ne.s32.totalorder %s161, %s163
      %p167 = scmp.eq.s32.totalorder %s17, 0
      %p168 = por %p166, %p167
      %p169 = scmp.ne.s32.totalorder %s161, %s163
      %p170 = scmp.eq.s32.totalorder %s22, 1
      %p171 = por %p169, %p170
      %p172 = scmp.ne.s32.totalorder %s163, %s164
      %p173 = scmp.eq.s32.totalorder %s22, 0
      %p174 = por %p172, %p173
      %p175 = scmp.ne.s32.totalorder %s163, %s164
      %p176 = scmp.eq.s32.totalorder %s23, 1
      %p177 = por %p175, %p176
      %p179 = scmp.ne.s32.totalorder %s164, %s178
      %p180 = scmp.eq.s32.totalorder %s23, 0
      %p181 = por %p179, %p180
      %s183 = sadd.s32 %s182, 1
      %p186 = scmp.eq.s32.totalorder %s17, 1
      %p187 = scmp.ne.s32.totalorder %s182, %s184
      %p188 = scmp.eq.s32.totalorder %s17, 0
      %p189 = por %p187, %p188
      %p190 = scmp.ne.s32.totalorder %s182, %s184
      %p191 = scmp.eq.s32.totalorder %s22, 1
      %p192 = por %p190, %p191
      %p193 = scmp.ne.s32.totalorder %s184, %s185
      %p194 = scmp.eq.s32.totalorder %s22, 0
      %p195 = por %p193, %p194
      %p196 = scmp.ne.s32.totalorder %s184, %s185
      %p197 = scmp.eq.s32.totalorder %s23, 1
      %p198 = por %p196, %p197
      %p200 = scmp.ne.s32.totalorder %s185, %s199
      %p201 = scmp.eq.s32.totalorder %s23, 0
      %p202 = por %p200, %p201
      %s203 = ssub.s32 %s17, %s24
      %p204 = scmp.eq.s32.totalorder %s203, 0
      %s206 = sadd.s32 %s205, 1
      %s207 = scalar_select %p204, %s205, %s206
      %p210 = pneg %p204
      %p211 = scmp.eq.s32.totalorder %s17, 1
      %p212 = por %p210, %p211
      %p213 = scmp.ne.s32.totalorder %s205, %s208
      %p214 = scmp.eq.s32.totalorder %s17, 0
      %p215 = por %p213, %p214
      %p216 = scmp.ne.s32.totalorder %s205, %s208
      %p217 = scmp.eq.s32.totalorder %s22, 1
      %p218 = por %p216, %p217
      %p219 = scmp.ne.s32.totalorder %s208, %s209
      %p220 = scmp.eq.s32.totalorder %s22, 0
      %p221 = por %p219, %p220
      %p222 = scmp.ne.s32.totalorder %s208, %s209
      %p223 = scmp.eq.s32.totalorder %s23, 1
      %p224 = por %p222, %p223
      %p226 = scmp.ne.s32.totalorder %s209, %s225
      %p227 = scmp.eq.s32.totalorder %s23, 0
      %p228 = por %p226, %p227
      %p229 = scmp.le.s32.totalorder 1, %s17
      %p230 = scmp.lt.s32.totalorder %s17, 3
      %p231 = pnand %p229, %p230
      %p232 = pneg %p231
      // Predicated region
      $region9: #{tpu_custom_call.1} parent=5 // pred_check
        _
      $region10: #{tpu_custom_call.1} parent=5 // pred_check_branch
        %234 = sbr.rel (%p231) target = $region12
      $region11: #{tpu_custom_call.1} parent=5 // pred_region
        %s235 = ssub.s32 %s17, 1
        // Predicated region
        $region13: #{tpu_custom_call.1} parent=11 // pred_check
          %p236 = pneg %p90
        $region14: #{tpu_custom_call.1} parent=11 // pred_check_branch
          %238 = sbr.rel (%p236) target = $region16
        $region15: #{tpu_custom_call.1} parent=11 // pred_region
          _
        $region16: #{tpu_custom_call.1} parent=11 // pred_fallthru
          _
        // Predicated region
        $region17: #{tpu_custom_call.1} parent=11 // pred_check
          %p239 = pneg %p111
        $region18: #{tpu_custom_call.1} parent=11 // pred_check_branch
          %241 = sbr.rel (%p239) target = $region20
        $region19: #{tpu_custom_call.1} parent=11 // pred_region
          _
        $region20: #{tpu_custom_call.1} parent=11 // pred_fallthru
          _
        // Predicated region
        $region21: #{tpu_custom_call.1} parent=11 // pred_check
          %p242 = pneg %p132
        $region22: #{tpu_custom_call.1} parent=11 // pred_check_branch
          %244 = sbr.rel (%p242) target = $region24
        $region23: #{tpu_custom_call.1} parent=11 // pred_region
          _
        $region24: #{tpu_custom_call.1} parent=11 // pred_fallthru
          _
        // Predicated region
        $region25: #{tpu_custom_call.1} parent=11 // pred_check
          %p245 = pneg %p153
        $region26: #{tpu_custom_call.1} parent=11 // pred_check_branch
          %247 = sbr.rel (%p245) target = $region28
        $region27: #{tpu_custom_call.1} parent=11 // pred_region
          _
        $region28: #{tpu_custom_call.1} parent=11 // pred_fallthru
          _
        // Predicated region
        $region29: #{tpu_custom_call.1} parent=11 // pred_check
          %p248 = pneg %p174
        $region30: #{tpu_custom_call.1} parent=11 // pred_check_branch
          %250 = sbr.rel (%p248) target = $region32
        $region31: #{tpu_custom_call.1} parent=11 // pred_region
          _
        $region32: #{tpu_custom_call.1} parent=11 // pred_fallthru
          _
        // Predicated region
        $region33: #{tpu_custom_call.1} parent=11 // pred_check
          %p251 = pneg %p195
        $region34: #{tpu_custom_call.1} parent=11 // pred_check_branch
          %253 = sbr.rel (%p251) target = $region36
        $region35: #{tpu_custom_call.1} parent=11 // pred_region
          _
        $region36: #{tpu_custom_call.1} parent=11 // pred_fallthru
          _
      $region12: #{tpu_custom_call.1} parent=5 // pred_fallthru
        _
      %p254 = scmp.lt.s32.totalorder %s17, 2
      // Predicated region
      $region37: #{tpu_custom_call.1} parent=5 // pred_check
        %p255 = pneg %p254
      $region38: #{tpu_custom_call.1} parent=5 // pred_check_branch
        %257 = sbr.rel (%p255) target = $region40
      $region39: #{tpu_custom_call.1} parent=5 // pred_region
        // Predicated region
        $region41: #{tpu_custom_call.1} parent=39 // pred_check
          %p258 = pneg %p37
        $region42: #{tpu_custom_call.1} parent=39 // pred_check_branch
          %260 = sbr.rel (%p258) target = $region44
        $region43: #{tpu_custom_call.1} parent=39 // pred_region
          %p261 = scmp.lt.s32.totalorder %s17, 1
          %s262 = scalar_select %p261, %s17, 1
          %s263 = smul.addr %s262, 8
          %s264 = scalar_lea.vmem %s0, %s263
        $region44: #{tpu_custom_call.1} parent=39 // pred_fallthru
          _
        // Predicated region
        $region45: #{tpu_custom_call.1} parent=39 // pred_check
          %p265 = pneg %p63
        $region46: #{tpu_custom_call.1} parent=39 // pred_check_branch
          %267 = sbr.rel (%p265) target = $region48
        $region47: #{tpu_custom_call.1} parent=39 // pred_region
          %p268 = scmp.lt.s32.totalorder %s17, 1
          %s269 = scalar_select %p268, %s17, 1
          %s270 = scalar_lea.vmem %s1, %s269
        $region48: #{tpu_custom_call.1} parent=39 // pred_fallthru
          _
      $region40: #{tpu_custom_call.1} parent=5 // pred_fallthru
        _
      %p271 = scmp.le.s32.totalorder 1, %s17
      %p272 = scmp.lt.s32.totalorder %s17, 3
      %p273 = pnand %p271, %p272
      %p274 = pneg %p273
      // Predicated region
      $region49: #{tpu_custom_call.1} parent=5 // pred_check
        _
      $region50: #{tpu_custom_call.1} parent=5 // pred_check_branch
        %276 = sbr.rel (%p273) target = $region52
      $region51: #{tpu_custom_call.1} parent=5 // pred_region
        %s277 = ssub.s32 %s17, 1
        %p278 = scmp.lt.s32.totalorder %s22, 1
        %s279 = scalar_select %p278, %s22, 1
        %s280 = smul.addr %s279, 8
        %s281 = scalar_lea.vmem %s0, %s280
        %p282 = pneg %p43
        %p283 = pneg %p40
        %p284 = scmp.lt.s32.totalorder %s22, 1
        %s285 = scalar_select %p284, %s22, 1
        %s286 = scalar_lea.vmem %s1, %s285
        %p287 = pneg %p69
        %p288 = pneg %p66
        %p289 = pneg %p90
        %p290 = pneg %p87
        %p291 = pneg %p111
        %p292 = pneg %p108
        %p293 = pneg %p132
        %p294 = pneg %p129
        %p295 = pneg %p153
        %p296 = pneg %p150
        %p297 = pneg %p174
        %p298 = pneg %p171
        %p299 = pneg %p195
        %p300 = pneg %p192
        %p301 = pneg %p221
        %p302 = pneg %p218
        %s303 = sand.u32 %s208, 1
        %s304 = scalar_lea.sflag [#allocation3], %s303
        %s305 = sand.u32 %s208, 1
        %s306 = smul.addr %s305, 8
        %s307 = scalar_lea.vmem [#allocation2], %s306
        %p308 = scmp.lt.s32.totalorder %s22, 1
        %s309 = scalar_select %p308, %s22, 1
        %s310 = smul.addr %s309, 8
        %s311 = scalar_lea.vmem %s0, %s310
        %p312 = scmp.lt.s32.totalorder %s22, 1
        %s313 = scalar_select %p312, %s22, 1
        %s314 = scalar_lea.vmem %s1, %s313
        %v316 = vld [vmem:[%s311] sm:$0xff]
        %317 = vxpose.xlu0.b32.start [1/16] %v316, 128
        %318 = vxpose.xlu0.b32.cont [2/16] 0.0, 128
        %319 = vxpose.xlu0.b32.cont [3/16] 0.0, 128
        %320 = vxpose.xlu0.b32.cont [4/16] 0.0, 128
        %321 = vxpose.xlu0.b32.cont [5/16] 0.0, 128
        %322 = vxpose.xlu0.b32.cont [6/16] 0.0, 128
        %323 = vxpose.xlu0.b32.cont [7/16] 0.0, 128
        %324 = vxpose.xlu0.b32.cont [8/16] 0.0, 128
        %325 = vxpose.xlu0.b32.cont [9/16] 0.0, 128
        %326 = vxpose.xlu0.b32.cont [10/16] 0.0, 128
        %327 = vxpose.xlu0.b32.cont [11/16] 0.0, 128
        %328 = vxpose.xlu0.b32.cont [12/16] 0.0, 128
        %329 = vxpose.xlu0.b32.cont [13/16] 0.0, 128
        %330 = vxpose.xlu0.b32.cont [14/16] 0.0, 128
        %331 = vxpose.xlu0.b32.cont [15/16] 0.0, 128
        %332 = vxpose.xlu0.b32.end [16/16] 0.0, 128
        %v333 = vpop.trf.xlu0
        %v334 = vpop.trf.xlu0
        %v335 = vpop.trf.xlu0
        %v336 = vpop.trf.xlu0
        %v337 = vpop.trf.xlu0
        %v338 = vpop.trf.xlu0
        %v339 = vpop.trf.xlu0
        %v340 = vpop.trf.xlu0
        %v341 = vpop.trf.xlu0
        %v342 = vpop.trf.xlu0
        %v343 = vpop.trf.xlu0
        %v344 = vpop.trf.xlu0
        %v345 = vpop.trf.xlu0
        %v346 = vpop.trf.xlu0
        %v347 = vpop.trf.xlu0
        %v348 = vpop.trf.xlu0
        %v349 = vld [vmem:[%s2] sm:$0xf]
        %v350 = vld [vmem:[%s2 + $0x4] sm:$0xf]
        %v351 = vld [vmem:[%s2 + $0x8] sm:$0xf]
        %v352 = vld [vmem:[%s2 + $0xc] sm:$0xf]
        %v353 = vld [vmem:[%s2 + $0x10] sm:$0xf]
        %v354 = vld [vmem:[%s2 + $0x14] sm:$0xf]
        %v355 = vld [vmem:[%s2 + $0x18] sm:$0xf]
        %v356 = vld [vmem:[%s2 + $0x1c] sm:$0xf]
        %v357 = vld [vmem:[%s2 + $0x20] sm:$0xf]
        %v358 = vld [vmem:[%s2 + $0x24] sm:$0xf]
        %v359 = vld [vmem:[%s2 + $0x28] sm:$0xf]
        %v360 = vld [vmem:[%s2 + $0x2c] sm:$0xf]
        %v361 = vpack.c.bf16 %v334, %v333
        %v362 = vpack.c.bf16 %v336, %v335
        %v363 = vld [vmem:[%s3] sm:$0xff]
        %v364 = vld [vmem:[%s3 + $0x8] sm:$0xff]
        %v365 = vld [vmem:[%s3 + $0x10] sm:$0xff]
        %v366 = vld [vmem:[%s3 + $0x18] sm:$0xff]
        %v367 = vld [vmem:[%s3 + $0x20] sm:$0xff]
        %v368 = vld [vmem:[%s3 + $0x28] sm:$0xff]
        %v369 = vld [vmem:[%s3 + $0x30] sm:$0xff]
        %v370 = vld [vmem:[%s3 + $0x38] sm:$0xff]
        %v371 = vld [vmem:[%s3 + $0x40] sm:$0xff]
        %v372 = vld [vmem:[%s3 + $0x48] sm:$0xff]
        %v373 = vld [vmem:[%s3 + $0x50] sm:$0xff]
        %v374 = vld [vmem:[%s3 + $0x58] sm:$0xff]
        %376 = vset.pattern.permute.xlu0 0
        %377 = vperm.xlu0 %376, %v363
        %v378 = vpop.permute.xlu0 %377
        %381 = vset.pattern.permute.xlu0 0
        %382 = vperm.xlu0 %381, %v364
        %v383 = vpop.permute.xlu0 %382
        %386 = vset.pattern.permute.xlu0 0
        %387 = vperm.xlu0 %386, %v365
        %v388 = vpop.permute.xlu0 %387
        %391 = vset.pattern.permute.xlu0 0
        %392 = vperm.xlu0 %391, %v366
        %v393 = vpop.permute.xlu0 %392
        %396 = vset.pattern.permute.xlu0 0
        %397 = vperm.xlu0 %396, %v367
        %v398 = vpop.permute.xlu0 %397
        %401 = vset.pattern.permute.xlu0 0
        %402 = vperm.xlu0 %401, %v368
        %v403 = vpop.permute.xlu0 %402
        %406 = vset.pattern.permute.xlu0 0
        %407 = vperm.xlu0 %406, %v369
        %v408 = vpop.permute.xlu0 %407
        %411 = vset.pattern.permute.xlu0 0
        %412 = vperm.xlu0 %411, %v370
        %v413 = vpop.permute.xlu0 %412
        %416 = vset.pattern.permute.xlu0 0
        %417 = vperm.xlu0 %416, %v371
        %v418 = vpop.permute.xlu0 %417
        %421 = vset.pattern.permute.xlu0 0
        %422 = vperm.xlu0 %421, %v372
        %v423 = vpop.permute.xlu0 %422
        %426 = vset.pattern.permute.xlu0 0
        %427 = vperm.xlu0 %426, %v373
        %v428 = vpop.permute.xlu0 %427
        %431 = vset.pattern.permute.xlu0 0
        %432 = vperm.xlu0 %431, %v374
        %v433 = vpop.permute.xlu0 %432
        %v447 = vunpack.c.l.b16 %v349
        %v448 = vunpack.c.l.b16 %v350
        %v449 = vunpack.c.l.b16 %v351
        %v450 = vunpack.c.l.b16 %v352
        %v451 = vunpack.c.l.b16 %v353
        %v452 = vunpack.c.l.b16 %v354
        %v453 = vunpack.c.l.b16 %v355
        %v454 = vunpack.c.l.b16 %v356
        %v455 = vunpack.c.l.b16 %v357
        %v456 = vunpack.c.l.b16 %v358
        %v457 = vunpack.c.l.b16 %v359
        %v458 = vunpack.c.l.b16 %v360
        %v459 = vpack.c.b16 %v448, %v447
        %v460 = vpack.c.b16 %v450, %v449
        %v461 = vpack.c.b16 %v452, %v451
        %v462 = vpack.c.b16 %v454, %v453
        %v463 = vpack.c.b16 %v456, %v455
        %v464 = vpack.c.b16 %v458, %v457
        %vm465 = vcmask 261120
        %v467 = vsel %vm465, %v459, 0
        %v470 = vsel %vm465, %v460, 0
        %v473 = vsel %vm465, %v461, 0
        %v476 = vsel %vm465, %v462, 0
        %v479 = vsel %vm465, %v463, 0
        %v482 = vsel %vm465, %v464, 0
        %484 = vmatprep.subr.bf16.mxu0 0
        %485 = vmatpush1.bf16.msra.mxu0 %v361
        %486 = vmatprep.subr.bf16.mxu0 0
        %487 = vmatpush1.bf16.msra.mxu0 %v362
        %488 = vmatprep.subr.bf16.mxu0 0
        %489 = vmatpush1.bf16.msra.mxu0 0
        %490 = vmatprep.subr.bf16.mxu0 0
        %491 = vmatpush1.bf16.msra.mxu0 0
        %492 = vmatprep.subr.bf16.mxu0 0
        %493 = vmatpush1.bf16.msra.mxu0 0
        %494 = vmatprep.subr.bf16.mxu0 0
        %495 = vmatpush1.bf16.msra.mxu0 0
        %496 = vmatprep.subr.bf16.mxu0 0
        %497 = vmatpush1.bf16.msra.mxu0 0
        %498 = vmatprep.subr.bf16.mxu0 0
        %499 = vmatpush1.bf16.msra.mxu0 0
        %500 = vmatprep.subr.bf16.mxu0 0
        %501 = vmatpush1.bf16.msra.mxu0 0
        %502 = vmatprep.subr.bf16.mxu0 0
        %503 = vmatpush1.bf16.msra.mxu0 0
        %504 = vmatprep.subr.bf16.mxu0 0
        %505 = vmatpush1.bf16.msra.mxu0 0
        %506 = vmatprep.subr.bf16.mxu0 0
        %507 = vmatpush1.bf16.msra.mxu0 0
        %508 = vmatprep.subr.bf16.mxu0 0
        %509 = vmatpush1.bf16.msra.mxu0 0
        %510 = vmatprep.subr.bf16.mxu0 0
        %511 = vmatpush1.bf16.msra.mxu0 0
        %512 = vmatprep.subr.bf16.mxu0 0
        %513 = vmatpush1.bf16.msra.mxu0 0
        %514 = vmatprep.subr.bf16.mxu0 0
        %515 = vmatpush1.bf16.msra.mxu0 0
        %516 = vmatprep.mubr.bf16.mxu0 0
        %517 = vmatmul.mubr.bf16.gmra.mrb[0].mxu0 %v467
        %v518 = vpop.f32.mrb[0].mxu0
        %v519 = vadd.f32 %v378, %v518
        %v520 = vpop.f32.mrb[0].mxu0
        %v521 = vpop.f32.mrb[0].mxu0
        %v522 = vadd.f32 %v383, %v521
        %v523 = vpop.f32.mrb[0].mxu0
        %524 = vmatprep.mubr.bf16.mxu0 0
        %525 = vmatmul.mubr.bf16.gmra.mrb[0].mxu0 %v470
        %v526 = vpop.f32.mrb[0].mxu0
        %v527 = vadd.f32 %v388, %v526
        %v528 = vpop.f32.mrb[0].mxu0
        %v529 = vpop.f32.mrb[0].mxu0
        %v530 = vadd.f32 %v393, %v529
        %v531 = vpop.f32.mrb[0].mxu0
        %532 = vmatprep.mubr.bf16.mxu0 0
        %533 = vmatmul.mubr.bf16.gmra.mrb[0].mxu0 %v473
        %v534 = vpop.f32.mrb[0].mxu0
        %v535 = vadd.f32 %v398, %v534
        %v536 = vpop.f32.mrb[0].mxu0
        %v537 = vpop.f32.mrb[0].mxu0
        %v538 = vadd.f32 %v403, %v537
        %v539 = vpop.f32.mrb[0].mxu0
        %540 = vmatprep.mubr.bf16.mxu0 0
        %541 = vmatmul.mubr.bf16.gmra.mrb[0].mxu0 %v476
        %v542 = vpop.f32.mrb[0].mxu0
        %v543 = vadd.f32 %v408, %v542
        %v544 = vpop.f32.mrb[0].mxu0
        %v545 = vpop.f32.mrb[0].mxu0
        %v546 = vadd.f32 %v413, %v545
        %v547 = vpop.f32.mrb[0].mxu0
        %548 = vmatprep.mubr.bf16.mxu0 0
        %549 = vmatmul.mubr.bf16.gmra.mrb[0].mxu0 %v479
        %v550 = vpop.f32.mrb[0].mxu0
        %v551 = vadd.f32 %v418, %v550
        %v552 = vpop.f32.mrb[0].mxu0
        %v553 = vpop.f32.mrb[0].mxu0
        %v554 = vadd.f32 %v423, %v553
        %v555 = vpop.f32.mrb[0].mxu0
        %556 = vmatprep.mubr.bf16.mxu0 0
        %557 = vmatmul.mubr.bf16.gmra.mrb[0].mxu0 %v482
        %v558 = vpop.f32.mrb[0].mxu0
        %v559 = vadd.f32 %v428, %v558
        %v560 = vpop.f32.mrb[0].mxu0
        %v561 = vpop.f32.mrb[0].mxu0
        %v562 = vadd.f32 %v433, %v561
        %v563 = vpop.f32.mrb[0].mxu0
        %564 = vdwg.mxu0
        %565 = vxpose.xlu0.b32.start [1/16] %v519, 128
        %566 = vxpose.xlu0.b32.cont [2/16] 0.0, 128
        %567 = vxpose.xlu0.b32.cont [3/16] 0.0, 128
        %568 = vxpose.xlu0.b32.cont [4/16] 0.0, 128
        %569 = vxpose.xlu0.b32.cont [5/16] 0.0, 128
        %570 = vxpose.xlu0.b32.cont [6/16] 0.0, 128
        %571 = vxpose.xlu0.b32.cont [7/16] 0.0, 128
        %572 = vxpose.xlu0.b32.cont [8/16] 0.0, 128
        %573 = vxpose.xlu0.b32.cont [9/16] 0.0, 128
        %574 = vxpose.xlu0.b32.cont [10/16] 0.0, 128
        %575 = vxpose.xlu0.b32.cont [11/16] 0.0, 128
        %576 = vxpose.xlu0.b32.cont [12/16] 0.0, 128
        %577 = vxpose.xlu0.b32.cont [13/16] 0.0, 128
        %578 = vxpose.xlu0.b32.cont [14/16] 0.0, 128
        %579 = vxpose.xlu0.b32.cont [15/16] 0.0, 128
        %580 = vxpose.xlu0.b32.end [16/16] 0.0, 128
        %v581 = vpop.trf.xlu0
        %v582 = vpop.trf.xlu0
        %v583 = vpop.trf.xlu0
        %v584 = vpop.trf.xlu0
        %v585 = vpop.trf.xlu0
        %v586 = vpop.trf.xlu0
        %v587 = vpop.trf.xlu0
        %v588 = vpop.trf.xlu0
        %v589 = vpop.trf.xlu0
        %v590 = vpop.trf.xlu0
        %v591 = vpop.trf.xlu0
        %v592 = vpop.trf.xlu0
        %v593 = vpop.trf.xlu0
        %v594 = vpop.trf.xlu0
        %v595 = vpop.trf.xlu0
        %v596 = vpop.trf.xlu0
        %597 = vxpose.xlu0.b32.start [1/16] %v522, 128
        %598 = vxpose.xlu0.b32.cont [2/16] 0.0, 128
        %599 = vxpose.xlu0.b32.cont [3/16] 0.0, 128
        %600 = vxpose.xlu0.b32.cont [4/16] 0.0, 128
        %601 = vxpose.xlu0.b32.cont [5/16] 0.0, 128
        %602 = vxpose.xlu0.b32.cont [6/16] 0.0, 128
        %603 = vxpose.xlu0.b32.cont [7/16] 0.0, 128
        %604 = vxpose.xlu0.b32.cont [8/16] 0.0, 128
        %605 = vxpose.xlu0.b32.cont [9/16] 0.0, 128
        %606 = vxpose.xlu0.b32.cont [10/16] 0.0, 128
        %607 = vxpose.xlu0.b32.cont [11/16] 0.0, 128
        %608 = vxpose.xlu0.b32.cont [12/16] 0.0, 128
        %609 = vxpose.xlu0.b32.cont [13/16] 0.0, 128
        %610 = vxpose.xlu0.b32.cont [14/16] 0.0, 128
        %611 = vxpose.xlu0.b32.cont [15/16] 0.0, 128
        %612 = vxpose.xlu0.b32.end [16/16] 0.0, 128
        %v613 = vpop.trf.xlu0
        %v614 = vpop.trf.xlu0
        %v615 = vpop.trf.xlu0
        %v616 = vpop.trf.xlu0
        %v617 = vpop.trf.xlu0
        %v618 = vpop.trf.xlu0
        %v619 = vpop.trf.xlu0
        %v620 = vpop.trf.xlu0
        %v621 = vpop.trf.xlu0
        %v622 = vpop.trf.xlu0
        %v623 = vpop.trf.xlu0
        %v624 = vpop.trf.xlu0
        %v625 = vpop.trf.xlu0
        %v626 = vpop.trf.xlu0
        %v627 = vpop.trf.xlu0
        %v628 = vpop.trf.xlu0
        %629 = vxpose.xlu0.b32.start [1/16] %v527, 128
        %630 = vxpose.xlu0.b32.cont [2/16] 0.0, 128
        %631 = vxpose.xlu0.b32.cont [3/16] 0.0, 128
        %632 = vxpose.xlu0.b32.cont [4/16] 0.0, 128
        %633 = vxpose.xlu0.b32.cont [5/16] 0.0, 128
        %634 = vxpose.xlu0.b32.cont [6/16] 0.0, 128
        %635 = vxpose.xlu0.b32.cont [7/16] 0.0, 128
        %636 = vxpose.xlu0.b32.cont [8/16] 0.0, 128
        %637 = vxpose.xlu0.b32.cont [9/16] 0.0, 128
        %638 = vxpose.xlu0.b32.cont [10/16] 0.0, 128
        %639 = vxpose.xlu0.b32.cont [11/16] 0.0, 128
        %640 = vxpose.xlu0.b32.cont [12/16] 0.0, 128
        %641 = vxpose.xlu0.b32.cont [13/16] 0.0, 128
        %642 = vxpose.xlu0.b32.cont [14/16] 0.0, 128
        %643 = vxpose.xlu0.b32.cont [15/16] 0.0, 128
        %644 = vxpose.xlu0.b32.end [16/16] 0.0, 128
        %v645 = vpop.trf.xlu0
        %v646 = vpop.trf.xlu0
        %v647 = vpop.trf.xlu0
        %v648 = vpop.trf.xlu0
        %v649 = vpop.trf.xlu0
        %v650 = vpop.trf.xlu0
        %v651 = vpop.trf.xlu0
        %v652 = vpop.trf.xlu0
        %v653 = vpop.trf.xlu0
        %v654 = vpop.trf.xlu0
        %v655 = vpop.trf.xlu0
        %v656 = vpop.trf.xlu0
        %v657 = vpop.trf.xlu0
        %v658 = vpop.trf.xlu0
        %v659 = vpop.trf.xlu0
        %v660 = vpop.trf.xlu0
        %661 = vxpose.xlu0.b32.start [1/16] %v530, 128
        %662 = vxpose.xlu0.b32.cont [2/16] 0.0, 128
        %663 = vxpose.xlu0.b32.cont [3/16] 0.0, 128
        %664 = vxpose.xlu0.b32.cont [4/16] 0.0, 128
        %665 = vxpose.xlu0.b32.cont [5/16] 0.0, 128
        %666 = vxpose.xlu0.b32.cont [6/16] 0.0, 128
        %667 = vxpose.xlu0.b32.cont [7/16] 0.0, 128
        %668 = vxpose.xlu0.b32.cont [8/16] 0.0, 128
        %669 = vxpose.xlu0.b32.cont [9/16] 0.0, 128
        %670 = vxpose.xlu0.b32.cont [10/16] 0.0, 128
        %671 = vxpose.xlu0.b32.cont [11/16] 0.0, 128
        %672 = vxpose.xlu0.b32.cont [12/16] 0.0, 128
        %673 = vxpose.xlu0.b32.cont [13/16] 0.0, 128
        %674 = vxpose.xlu0.b32.cont [14/16] 0.0, 128
        %675 = vxpose.xlu0.b32.cont [15/16] 0.0, 128
        %676 = vxpose.xlu0.b32.end [16/16] 0.0, 128
        %v677 = vpop.trf.xlu0
        %v678 = vpop.trf.xlu0
        %v679 = vpop.trf.xlu0
        %v680 = vpop.trf.xlu0
        %v681 = vpop.trf.xlu0
        %v682 = vpop.trf.xlu0
        %v683 = vpop.trf.xlu0
        %v684 = vpop.trf.xlu0
        %v685 = vpop.trf.xlu0
        %v686 = vpop.trf.xlu0
        %v687 = vpop.trf.xlu0
        %v688 = vpop.trf.xlu0
        %v689 = vpop.trf.xlu0
        %v690 = vpop.trf.xlu0
        %v691 = vpop.trf.xlu0
        %v692 = vpop.trf.xlu0
        %v693 = vpack.c.bf16 %v581, %v581
        %v694 = vpack.c.bf16 %v613, %v613
        %v695 = vpack.c.bf16 %v645, %v645
        %v696 = vpack.c.bf16 %v677, %v677
        %v697 = vpack.c.bf16 %v535, %v535
        %v698 = vpack.c.bf16 %v538, %v538
        %v699 = vpack.c.bf16 %v543, %v543
        %v700 = vpack.c.bf16 %v546, %v546
        %vm701 = vcmask 64512
        %v703 = vsel %vm701, %v693, 0
        %vm705 = vcmask 1043456
        %v707 = vsel %vm705, %v697, 0
        %709 = vmatprep.subr.bf16.mxu0 0
        %710 = vmatpush1.bf16.msra.mxu0 %v707
        %711 = vmatprep.subr.bf16.mxu0 0
        %712 = vmatpush1.bf16.msra.mxu0 0
        %713 = vmatprep.subr.bf16.mxu0 0
        %714 = vmatpush1.bf16.msra.mxu0 0
        %715 = vmatprep.subr.bf16.mxu0 0
        %716 = vmatpush1.bf16.msra.mxu0 0
        %717 = vmatprep.subr.bf16.mxu0 0
        %718 = vmatpush1.bf16.msra.mxu0 0
        %719 = vmatprep.subr.bf16.mxu0 0
        %720 = vmatpush1.bf16.msra.mxu0 0
        %721 = vmatprep.subr.bf16.mxu0 0
        %722 = vmatpush1.bf16.msra.mxu0 0
        %723 = vmatprep.subr.bf16.mxu0 0
        %724 = vmatpush1.bf16.msra.mxu0 0
        %725 = vmatprep.subr.bf16.mxu0 0
        %726 = vmatpush1.bf16.msra.mxu0 0
        %727 = vmatprep.subr.bf16.mxu0 0
        %728 = vmatpush1.bf16.msra.mxu0 0
        %729 = vmatprep.subr.bf16.mxu0 0
        %730 = vmatpush1.bf16.msra.mxu0 0
        %731 = vmatprep.subr.bf16.mxu0 0
        %732 = vmatpush1.bf16.msra.mxu0 0
        %733 = vmatprep.subr.bf16.mxu0 0
        %734 = vmatpush1.bf16.msra.mxu0 0
        %735 = vmatprep.subr.bf16.mxu0 0
        %736 = vmatpush1.bf16.msra.mxu0 0
        %737 = vmatprep.subr.bf16.mxu0 0
        %738 = vmatpush1.bf16.msra.mxu0 0
        %739 = vmatprep.subr.bf16.mxu0 0
        %740 = vmatpush1.bf16.msra.mxu0 0
        %741 = vmatprep.mubr.bf16.mxu0 0
        %742 = vmatmul.mubr.bf16.gmra.mrb[0].mxu0 %v703
        %v743 = vpop.f32.mrb[0].mxu0
        %v744 = vadd.f32 0.0, %v743
        %v745 = vpop.f32.mrb[0].mxu0
        %v746 = vpop.f32.mrb[0].mxu0
        %v747 = vpop.f32.mrb[0].mxu0
        %748 = vdwg.mxu0
        %v750 = vsel %vm701, %v694, 0
        %v753 = vsel %vm705, %v698, 0
        %755 = vmatprep.subr.bf16.mxu0 0
        %756 = vmatpush1.bf16.msra.mxu0 %v753
        %757 = vmatprep.subr.bf16.mxu0 0
        %758 = vmatpush1.bf16.msra.mxu0 0
        %759 = vmatprep.subr.bf16.mxu0 0
        %760 = vmatpush1.bf16.msra.mxu0 0
        %761 = vmatprep.subr.bf16.mxu0 0
        %762 = vmatpush1.bf16.msra.mxu0 0
        %763 = vmatprep.subr.bf16.mxu0 0
        %764 = vmatpush1.bf16.msra.mxu0 0
        %765 = vmatprep.subr.bf16.mxu0 0
        %766 = vmatpush1.bf16.msra.mxu0 0
        %767 = vmatprep.subr.bf16.mxu0 0
        %768 = vmatpush1.bf16.msra.mxu0 0
        %769 = vmatprep.subr.bf16.mxu0 0
        %770 = vmatpush1.bf16.msra.mxu0 0
        %771 = vmatprep.subr.bf16.mxu0 0
        %772 = vmatpush1.bf16.msra.mxu0 0
        %773 = vmatprep.subr.bf16.mxu0 0
        %774 = vmatpush1.bf16.msra.mxu0 0
        %775 = vmatprep.subr.bf16.mxu0 0
        %776 = vmatpush1.bf16.msra.mxu0 0
        %777 = vmatprep.subr.bf16.mxu0 0
        %778 = vmatpush1.bf16.msra.mxu0 0
        %779 = vmatprep.subr.bf16.mxu0 0
        %780 = vmatpush1.bf16.msra.mxu0 0
        %781 = vmatprep.subr.bf16.mxu0 0
        %782 = vmatpush1.bf16.msra.mxu0 0
        %783 = vmatprep.subr.bf16.mxu0 0
        %784 = vmatpush1.bf16.msra.mxu0 0
        %785 = vmatprep.subr.bf16.mxu0 0
        %786 = vmatpush1.bf16.msra.mxu0 0
        %787 = vmatprep.mubr.bf16.mxu0 0
        %788 = vmatmul.mubr.bf16.gmra.mrb[0].mxu0 %v750
        %v789 = vpop.f32.mrb[0].mxu0
        %v790 = vadd.f32 0.0, %v789
        %v791 = vpop.f32.mrb[0].mxu0
        %v792 = vpop.f32.mrb[0].mxu0
        %v793 = vpop.f32.mrb[0].mxu0
        %794 = vdwg.mxu0
        %v796 = vsel %vm701, %v695, 0
        %v799 = vsel %vm705, %v699, 0
        %801 = vmatprep.subr.bf16.mxu0 0
        %802 = vmatpush1.bf16.msra.mxu0 %v799
        %803 = vmatprep.subr.bf16.mxu0 0
        %804 = vmatpush1.bf16.msra.mxu0 0
        %805 = vmatprep.subr.bf16.mxu0 0
        %806 = vmatpush1.bf16.msra.mxu0 0
        %807 = vmatprep.subr.bf16.mxu0 0
        %808 = vmatpush1.bf16.msra.mxu0 0
        %809 = vmatprep.subr.bf16.mxu0 0
        %810 = vmatpush1.bf16.msra.mxu0 0
        %811 = vmatprep.subr.bf16.mxu0 0
        %812 = vmatpush1.bf16.msra.mxu0 0
        %813 = vmatprep.subr.bf16.mxu0 0
        %814 = vmatpush1.bf16.msra.mxu0 0
        %815 = vmatprep.subr.bf16.mxu0 0
        %816 = vmatpush1.bf16.msra.mxu0 0
        %817 = vmatprep.subr.bf16.mxu0 0
        %818 = vmatpush1.bf16.msra.mxu0 0
        %819 = vmatprep.subr.bf16.mxu0 0
        %820 = vmatpush1.bf16.msra.mxu0 0
        %821 = vmatprep.subr.bf16.mxu0 0
        %822 = vmatpush1.bf16.msra.mxu0 0
        %823 = vmatprep.subr.bf16.mxu0 0
        %824 = vmatpush1.bf16.msra.mxu0 0
        %825 = vmatprep.subr.bf16.mxu0 0
        %826 = vmatpush1.bf16.msra.mxu0 0
        %827 = vmatprep.subr.bf16.mxu0 0
        %828 = vmatpush1.bf16.msra.mxu0 0
        %829 = vmatprep.subr.bf16.mxu0 0
        %830 = vmatpush1.bf16.msra.mxu0 0
        %831 = vmatprep.subr.bf16.mxu0 0
        %832 = vmatpush1.bf16.msra.mxu0 0
        %833 = vmatprep.mubr.bf16.mxu0 0
        %834 = vmatmul.mubr.bf16.gmra.mrb[0].mxu0 %v796
        %v835 = vpop.f32.mrb[0].mxu0
        %v836 = vadd.f32 0.0, %v835
        %v837 = vpop.f32.mrb[0].mxu0
        %v838 = vpop.f32.mrb[0].mxu0
        %v839 = vpop.f32.mrb[0].mxu0
        %840 = vdwg.mxu0
        %v842 = vsel %vm701, %v696, 0
        %v845 = vsel %vm705, %v700, 0
        %847 = vmatprep.subr.bf16.mxu0 0
        %848 = vmatpush1.bf16.msra.mxu0 %v845
        %849 = vmatprep.subr.bf16.mxu0 0
        %850 = vmatpush1.bf16.msra.mxu0 0
        %851 = vmatprep.subr.bf16.mxu0 0
        %852 = vmatpush1.bf16.msra.mxu0 0
        %853 = vmatprep.subr.bf16.mxu0 0
        %854 = vmatpush1.bf16.msra.mxu0 0
        %855 = vmatprep.subr.bf16.mxu0 0
        %856 = vmatpush1.bf16.msra.mxu0 0
        %857 = vmatprep.subr.bf16.mxu0 0
        %858 = vmatpush1.bf16.msra.mxu0 0
        %859 = vmatprep.subr.bf16.mxu0 0
        %860 = vmatpush1.bf16.msra.mxu0 0
        %861 = vmatprep.subr.bf16.mxu0 0
        %862 = vmatpush1.bf16.msra.mxu0 0
        %863 = vmatprep.subr.bf16.mxu0 0
        %864 = vmatpush1.bf16.msra.mxu0 0
        %865 = vmatprep.subr.bf16.mxu0 0
        %866 = vmatpush1.bf16.msra.mxu0 0
        %867 = vmatprep.subr.bf16.mxu0 0
        %868 = vmatpush1.bf16.msra.mxu0 0
        %869 = vmatprep.subr.bf16.mxu0 0
        %870 = vmatpush1.bf16.msra.mxu0 0
        %871 = vmatprep.subr.bf16.mxu0 0
        %872 = vmatpush1.bf16.msra.mxu0 0
        %873 = vmatprep.subr.bf16.mxu0 0
        %874 = vmatpush1.bf16.msra.mxu0 0
        %875 = vmatprep.subr.bf16.mxu0 0
        %876 = vmatpush1.bf16.msra.mxu0 0
        %877 = vmatprep.subr.bf16.mxu0 0
        %878 = vmatpush1.bf16.msra.mxu0 0
        %879 = vmatprep.mubr.bf16.mxu0 0
        %880 = vmatmul.mubr.bf16.gmra.mrb[0].mxu0 %v842
        %v881 = vpop.f32.mrb[0].mxu0
        %v882 = vadd.f32 0.0, %v881
        %v883 = vpop.f32.mrb[0].mxu0
        %v884 = vpop.f32.mrb[0].mxu0
        %v885 = vpop.f32.mrb[0].mxu0
        %886 = vdwg.mxu0
        %v887 = vmul.f32 %v744, 0.35355338
        %v888 = vmul.f32 %v790, 0.35355338
        %v889 = vmul.f32 %v836, 0.35355338
        %v890 = vmul.f32 %v882, 0.35355338
        %v891 = vld [vmem:[%s314] sm:$0x1]
        %v893 = vlaneseq
        %v894 = vshrl.u32 %v893, 7
        %v895 = vsub.s32 0, %v894
        %v896 = vrot.slane %v891, %v895
        %v898 = vadd.f32 %v887, %v896
        %v899 = vadd.f32 %v888, %v896
        %v900 = vadd.f32 %v889, %v896
        %v901 = vadd.f32 %v890, %v896
        %v902 = vsel %vm701, %v898, -inf
        %903 = vmax.xlane.f32.xlu0 %v902
        %v904 = vpop.xlane.xlu0 %903
        %v905 = vsel %vm701, %v899, -inf
        %906 = vmax.xlane.f32.xlu0 %v905
        %v907 = vpop.xlane.xlu0 %906
        %v908 = vsel %vm701, %v900, -inf
        %909 = vmax.xlane.f32.xlu0 %v908
        %v910 = vpop.xlane.xlu0 %909
        %v911 = vsel %vm701, %v901, -inf
        %912 = vmax.xlane.f32.xlu0 %v911
        %v913 = vpop.xlane.xlu0 %912
        %v914 = vsub.f32 %v898, %v904
        %v915 = vsub.f32 %v899, %v907
        %v916 = vsub.f32 %v900, %v910
        %v917 = vsub.f32 %v901, %v913
        %v918 = vmul.f32 %v914, 1.442695
        %v919 = vpow.pop %v918
        %v920 = vmul.f32 %v915, 1.442695
        %v921 = vpow.pop %v920
        %v922 = vmul.f32 %v916, 1.442695
        %v923 = vpow.pop %v922
        %v924 = vmul.f32 %v917, 1.442695
        %v925 = vpow.pop %v924
        %v926 = vsel %vm701, %v919, 0.0
        %927 = vadd.xlane.f32.xlu0 %v926
        %v928 = vpop.xlane.xlu0 %927
        %v929 = vsel %vm701, %v921, 0.0
        %930 = vadd.xlane.f32.xlu0 %v929
        %v931 = vpop.xlane.xlu0 %930
        %v932 = vsel %vm701, %v923, 0.0
        %933 = vadd.xlane.f32.xlu0 %v932
        %v934 = vpop.xlane.xlu0 %933
        %v935 = vsel %vm701, %v925, 0.0
        %936 = vadd.xlane.f32.xlu0 %v935
        %v937 = vpop.xlane.xlu0 %936
        %v938 = vrcp.pop %v928
        %v939 = vrcp.pop %v931
        %v940 = vrcp.pop %v934
        %v941 = vrcp.pop %v937
        %v942 = vmul.f32 %v919, %v938
        %v943 = vmul.f32 %v921, %v939
        %v944 = vmul.f32 %v923, %v940
        %v945 = vmul.f32 %v925, %v941
        %v946 = vpack.c.bf16 %v551, %v551
        %v947 = vpack.c.bf16 %v554, %v554
        %v948 = vpack.c.bf16 %v559, %v559
        %v949 = vpack.c.bf16 %v562, %v562
        %v950 = vpack.c.bf16 %v942, %v942
        %v951 = vpack.c.bf16 %v943, %v943
        %v952 = vpack.c.bf16 %v944, %v944
        %v953 = vpack.c.bf16 %v945, %v945
        %v955 = vsel %vm701, %v946, 0
        %v958 = vsel %vm701, %v950, 0
        %960 = vmatprep.subr.bf16.mxu0 0
        %961 = vmatpush1.bf16.xpose.msra.mxu0 %v958
        %962 = vmatprep.subr.bf16.mxu0 0
        %963 = vmatpush1.bf16.xpose.msra.mxu0 0
        %964 = vmatprep.subr.bf16.mxu0 0
        %965 = vmatpush1.bf16.xpose.msra.mxu0 0
        %966 = vmatprep.subr.bf16.mxu0 0
        %967 = vmatpush1.bf16.xpose.msra.mxu0 0
        %968 = vmatprep.subr.bf16.mxu0 0
        %969 = vmatpush1.bf16.xpose.msra.mxu0 0
        %970 = vmatprep.subr.bf16.mxu0 0
        %971 = vmatpush1.bf16.xpose.msra.mxu0 0
        %972 = vmatprep.subr.bf16.mxu0 0
        %973 = vmatpush1.bf16.xpose.msra.mxu0 0
        %974 = vmatprep.subr.bf16.mxu0 0
        %975 = vmatpush1.bf16.xpose.msra.mxu0 0
        %976 = vmatprep.subr.bf16.mxu0 0
        %977 = vmatpush1.bf16.xpose.msra.mxu0 0
        %978 = vmatprep.subr.bf16.mxu0 0
        %979 = vmatpush1.bf16.xpose.msra.mxu0 0
        %980 = vmatprep.subr.bf16.mxu0 0
        %981 = vmatpush1.bf16.xpose.msra.mxu0 0
        %982 = vmatprep.subr.bf16.mxu0 0
        %983 = vmatpush1.bf16.xpose.msra.mxu0 0
        %984 = vmatprep.subr.bf16.mxu0 0
        %985 = vmatpush1.bf16.xpose.msra.mxu0 0
        %986 = vmatprep.subr.bf16.mxu0 0
        %987 = vmatpush1.bf16.xpose.msra.mxu0 0
        %988 = vmatprep.subr.bf16.mxu0 0
        %989 = vmatpush1.bf16.xpose.msra.mxu0 0
        %990 = vmatprep.subr.bf16.mxu0 0
        %991 = vmatpush1.bf16.xpose.msra.mxu0 0
        %992 = vmatprep.mubr.bf16.mxu0 0
        %993 = vmatmul.mubr.bf16.gmra.mrb[0].mxu0 %v955
        %v994 = vpop.f32.mrb[0].mxu0
        %v995 = vadd.f32 0.0, %v994
        %v996 = vpop.f32.mrb[0].mxu0
        %v997 = vpop.f32.mrb[0].mxu0
        %v998 = vpop.f32.mrb[0].mxu0
        %999 = vdwg.mxu0
        %v1001 = vsel %vm701, %v947, 0
        %v1004 = vsel %vm701, %v951, 0
        %1006 = vmatprep.subr.bf16.mxu0 0
        %1007 = vmatpush1.bf16.xpose.msra.mxu0 %v1004
        %1008 = vmatprep.subr.bf16.mxu0 0
        %1009 = vmatpush1.bf16.xpose.msra.mxu0 0
        %1010 = vmatprep.subr.bf16.mxu0 0
        %1011 = vmatpush1.bf16.xpose.msra.mxu0 0
        %1012 = vmatprep.subr.bf16.mxu0 0
        %1013 = vmatpush1.bf16.xpose.msra.mxu0 0
        %1014 = vmatprep.subr.bf16.mxu0 0
        %1015 = vmatpush1.bf16.xpose.msra.mxu0 0
        %1016 = vmatprep.subr.bf16.mxu0 0
        %1017 = vmatpush1.bf16.xpose.msra.mxu0 0
        %1018 = vmatprep.subr.bf16.mxu0 0
        %1019 = vmatpush1.bf16.xpose.msra.mxu0 0
        %1020 = vmatprep.subr.bf16.mxu0 0
        %1021 = vmatpush1.bf16.xpose.msra.mxu0 0
        %1022 = vmatprep.subr.bf16.mxu0 0
        %1023 = vmatpush1.bf16.xpose.msra.mxu0 0
        %1024 = vmatprep.subr.bf16.mxu0 0
        %1025 = vmatpush1.bf16.xpose.msra.mxu0 0
        %1026 = vmatprep.subr.bf16.mxu0 0
        %1027 = vmatpush1.bf16.xpose.msra.mxu0 0
        %1028 = vmatprep.subr.bf16.mxu0 0
        %1029 = vmatpush1.bf16.xpose.msra.mxu0 0
        %1030 = vmatprep.subr.bf16.mxu0 0
        %1031 = vmatpush1.bf16.xpose.msra.mxu0 0
        %1032 = vmatprep.subr.bf16.mxu0 0
        %1033 = vmatpush1.bf16.xpose.msra.mxu0 0
        %1034 = vmatprep.subr.bf16.mxu0 0
        %1035 = vmatpush1.bf16.xpose.msra.mxu0 0
        %1036 = vmatprep.subr.bf16.mxu0 0
        %1037 = vmatpush1.bf16.xpose.msra.mxu0 0
        %1038 = vmatprep.mubr.bf16.mxu0 0
        %1039 = vmatmul.mubr.bf16.gmra.mrb[0].mxu0 %v1001
        %v1040 = vpop.f32.mrb[0].mxu0
        %v1041 = vadd.f32 0.0, %v1040
        %v1042 = vpop.f32.mrb[0].mxu0
        %v1043 = vpop.f32.mrb[0].mxu0
        %v1044 = vpop.f32.mrb[0].mxu0
        %1045 = vdwg.mxu0
        %v1047 = vsel %vm701, %v948, 0
        %v1050 = vsel %vm701, %v952, 0
        %1052 = vmatprep.subr.bf16.mxu0 0
        %1053 = vmatpush1.bf16.xpose.msra.mxu0 %v1050
        %1054 = vmatprep.subr.bf16.mxu0 0
        %1055 = vmatpush1.bf16.xpose.msra.mxu0 0
        %1056 = vmatprep.subr.bf16.mxu0 0
        %1057 = vmatpush1.bf16.xpose.msra.mxu0 0
        %1058 = vmatprep.subr.bf16.mxu0 0
        %1059 = vmatpush1.bf16.xpose.msra.mxu0 0
        %1060 = vmatprep.subr.bf16.mxu0 0
        %1061 = vmatpush1.bf16.xpose.msra.mxu0 0
        %1062 = vmatprep.subr.bf16.mxu0 0
        %1063 = vmatpush1.bf16.xpose.msra.mxu0 0
        %1064 = vmatprep.subr.bf16.mxu0 0
        %1065 = vmatpush1.bf16.xpose.msra.mxu0 0
        %1066 = vmatprep.subr.bf16.mxu0 0
        %1067 = vmatpush1.bf16.xpose.msra.mxu0 0
        %1068 = vmatprep.subr.bf16.mxu0 0
        %1069 = vmatpush1.bf16.xpose.msra.mxu0 0
        %1070 = vmatprep.subr.bf16.mxu0 0
        %1071 = vmatpush1.bf16.xpose.msra.mxu0 0
        %1072 = vmatprep.subr.bf16.mxu0 0
        %1073 = vmatpush1.bf16.xpose.msra.mxu0 0
        %1074 = vmatprep.subr.bf16.mxu0 0
        %1075 = vmatpush1.bf16.xpose.msra.mxu0 0
        %1076 = vmatprep.subr.bf16.mxu0 0
        %1077 = vmatpush1.bf16.xpose.msra.mxu0 0
        %1078 = vmatprep.subr.bf16.mxu0 0
        %1079 = vmatpush1.bf16.xpose.msra.mxu0 0
        %1080 = vmatprep.subr.bf16.mxu0 0
        %1081 = vmatpush1.bf16.xpose.msra.mxu0 0
        %1082 = vmatprep.subr.bf16.mxu0 0
        %1083 = vmatpush1.bf16.xpose.msra.mxu0 0
        %1084 = vmatprep.mubr.bf16.mxu0 0
        %1085 = vmatmul.mubr.bf16.gmra.mrb[0].mxu0 %v1047
        %v1086 = vpop.f32.mrb[0].mxu0
        %v1087 = vadd.f32 0.0, %v1086
        %v1088 = vpop.f32.mrb[0].mxu0
        %v1089 = vpop.f32.mrb[0].mxu0
        %v1090 = vpop.f32.mrb[0].mxu0
        %1091 = vdwg.mxu0
        %v1093 = vsel %vm701, %v949, 0
        %v1096 = vsel %vm701, %v953, 0
        %1098 = vmatprep.subr.bf16.mxu0 0
        %1099 = vmatpush1.bf16.xpose.msra.mxu0 %v1096
        %1100 = vmatprep.subr.bf16.mxu0 0
        %1101 = vmatpush1.bf16.xpose.msra.mxu0 0
        %1102 = vmatprep.subr.bf16.mxu0 0
        %1103 = vmatpush1.bf16.xpose.msra.mxu0 0
        %1104 = vmatprep.subr.bf16.mxu0 0
        %1105 = vmatpush1.bf16.xpose.msra.mxu0 0
        %1106 = vmatprep.subr.bf16.mxu0 0
        %1107 = vmatpush1.bf16.xpose.msra.mxu0 0
        %1108 = vmatprep.subr.bf16.mxu0 0
        %1109 = vmatpush1.bf16.xpose.msra.mxu0 0
        %1110 = vmatprep.subr.bf16.mxu0 0
        %1111 = vmatpush1.bf16.xpose.msra.mxu0 0
        %1112 = vmatprep.subr.bf16.mxu0 0
        %1113 = vmatpush1.bf16.xpose.msra.mxu0 0
        %1114 = vmatprep.subr.bf16.mxu0 0
        %1115 = vmatpush1.bf16.xpose.msra.mxu0 0
        %1116 = vmatprep.subr.bf16.mxu0 0
        %1117 = vmatpush1.bf16.xpose.msra.mxu0 0
        %1118 = vmatprep.subr.bf16.mxu0 0
        %1119 = vmatpush1.bf16.xpose.msra.mxu0 0
        %1120 = vmatprep.subr.bf16.mxu0 0
        %1121 = vmatpush1.bf16.xpose.msra.mxu0 0
        %1122 = vmatprep.subr.bf16.mxu0 0
        %1123 = vmatpush1.bf16.xpose.msra.mxu0 0
        %1124 = vmatprep.subr.bf16.mxu0 0
        %1125 = vmatpush1.bf16.xpose.msra.mxu0 0
        %1126 = vmatprep.subr.bf16.mxu0 0
        %1127 = vmatpush1.bf16.xpose.msra.mxu0 0
        %1128 = vmatprep.subr.bf16.mxu0 0
        %1129 = vmatpush1.bf16.xpose.msra.mxu0 0
        %1130 = vmatprep.mubr.bf16.mxu0 0
        %1131 = vmatmul.mubr.bf16.gmra.mrb[0].mxu0 %v1093
        %v1132 = vpop.f32.mrb[0].mxu0
        %v1133 = vadd.f32 0.0, %v1132
        %v1134 = vpop.f32.mrb[0].mxu0
        %v1135 = vpop.f32.mrb[0].mxu0
        %v1136 = vpop.f32.mrb[0].mxu0
        %1137 = vdwg.mxu0
        %v1138 = vld [vmem:[%s4] sm:$0xf]
        %v1139 = vld [vmem:[%s4 + $0x4] sm:$0xf]
        %v1140 = vld [vmem:[%s4 + $0x8] sm:$0xf]
        %v1141 = vld [vmem:[%s4 + $0xc] sm:$0xf]
        %v1142 = vpack.c.bf16 %v1041, %v995
        %v1143 = vpack.c.bf16 %v1133, %v1087
        %v1144 = vld [vmem:[%s5] sm:$0xff]
        %v1145 = vld [vmem:[%s5 + $0x8] sm:$0xff]
        %v1146 = vld [vmem:[%s5 + $0x10] sm:$0xff]
        %v1147 = vld [vmem:[%s5 + $0x18] sm:$0xff]
        %1149 = vset.pattern.permute.xlu0 0
        %1150 = vperm.xlu0 %1149, %v1144
        %v1151 = vpop.permute.xlu0 %1150
        %1154 = vset.pattern.permute.xlu0 0
        %1155 = vperm.xlu0 %1154, %v1145
        %v1156 = vpop.permute.xlu0 %1155
        %1159 = vset.pattern.permute.xlu0 0
        %1160 = vperm.xlu0 %1159, %v1146
        %v1161 = vpop.permute.xlu0 %1160
        %1164 = vset.pattern.permute.xlu0 0
        %1165 = vperm.xlu0 %1164, %v1147
        %v1166 = vpop.permute.xlu0 %1165
        %v1172 = vunpack.c.l.b16 %v1138
        %v1173 = vunpack.c.l.b16 %v1139
        %v1174 = vunpack.c.l.b16 %v1140
        %v1175 = vunpack.c.l.b16 %v1141
        %v1176 = vpack.c.b16 %v1173, %v1172
        %v1177 = vpack.c.b16 %v1175, %v1174
        %v1179 = vsel %vm465, %v1176, 0
        %v1182 = vsel %vm465, %v1177, 0
        %1184 = vmatprep.subr.bf16.mxu0 0
        %1185 = vmatpush1.bf16.msra.mxu0 %v1142
        %1186 = vmatprep.subr.bf16.mxu0 0
        %1187 = vmatpush1.bf16.msra.mxu0 %v1143
        %1188 = vmatprep.subr.bf16.mxu0 0
        %1189 = vmatpush1.bf16.msra.mxu0 0
        %1190 = vmatprep.subr.bf16.mxu0 0
        %1191 = vmatpush1.bf16.msra.mxu0 0
        %1192 = vmatprep.subr.bf16.mxu0 0
        %1193 = vmatpush1.bf16.msra.mxu0 0
        %1194 = vmatprep.subr.bf16.mxu0 0
        %1195 = vmatpush1.bf16.msra.mxu0 0
        %1196 = vmatprep.subr.bf16.mxu0 0
        %1197 = vmatpush1.bf16.msra.mxu0 0
        %1198 = vmatprep.subr.bf16.mxu0 0
        %1199 = vmatpush1.bf16.msra.mxu0 0
        %1200 = vmatprep.subr.bf16.mxu0 0
        %1201 = vmatpush1.bf16.msra.mxu0 0
        %1202 = vmatprep.subr.bf16.mxu0 0
        %1203 = vmatpush1.bf16.msra.mxu0 0
        %1204 = vmatprep.subr.bf16.mxu0 0
        %1205 = vmatpush1.bf16.msra.mxu0 0
        %1206 = vmatprep.subr.bf16.mxu0 0
        %1207 = vmatpush1.bf16.msra.mxu0 0
        %1208 = vmatprep.subr.bf16.mxu0 0
        %1209 = vmatpush1.bf16.msra.mxu0 0
        %1210 = vmatprep.subr.bf16.mxu0 0
        %1211 = vmatpush1.bf16.msra.mxu0 0
        %1212 = vmatprep.subr.bf16.mxu0 0
        %1213 = vmatpush1.bf16.msra.mxu0 0
        %1214 = vmatprep.subr.bf16.mxu0 0
        %1215 = vmatpush1.bf16.msra.mxu0 0
        %1216 = vmatprep.mubr.bf16.mxu0 0
        %1217 = vmatmul.mubr.bf16.gmra.mrb[0].mxu0 %v1179
        %v1218 = vpop.f32.mrb[0].mxu0
        %v1219 = vadd.f32 %v1151, %v1218
        %v1220 = vpop.f32.mrb[0].mxu0
        %v1221 = vpop.f32.mrb[0].mxu0
        %v1222 = vadd.f32 %v1156, %v1221
        %v1223 = vpop.f32.mrb[0].mxu0
        %1224 = vmatprep.mubr.bf16.mxu0 0
        %1225 = vmatmul.mubr.bf16.gmra.mrb[0].mxu0 %v1182
        %v1226 = vpop.f32.mrb[0].mxu0
        %v1227 = vadd.f32 %v1161, %v1226
        %v1228 = vpop.f32.mrb[0].mxu0
        %v1229 = vpop.f32.mrb[0].mxu0
        %v1230 = vadd.f32 %v1166, %v1229
        %v1231 = vpop.f32.mrb[0].mxu0
        %1232 = vdwg.mxu0
        %v1233 = vadd.f32 %v1219, %v333
        %v1234 = vadd.f32 %v1222, %v334
        %v1235 = vadd.f32 %v1227, %v335
        %v1236 = vadd.f32 %v1230, %v336
        %1237 = vxpose.xlu0.b32.start [1/16] %v1233, 128
        %1238 = vxpose.xlu0.b32.cont [2/16] %v1234, 128
        %1239 = vxpose.xlu0.b32.cont [3/16] %v1235, 128
        %1240 = vxpose.xlu0.b32.cont [4/16] %v1236, 128
        %1241 = vxpose.xlu0.b32.cont [5/16] 0.0, 128
        %1242 = vxpose.xlu0.b32.cont [6/16] 0.0, 128
        %1243 = vxpose.xlu0.b32.cont [7/16] 0.0, 128
        %1244 = vxpose.xlu0.b32.cont [8/16] 0.0, 128
        %1245 = vxpose.xlu0.b32.cont [9/16] 0.0, 128
        %1246 = vxpose.xlu0.b32.cont [10/16] 0.0, 128
        %1247 = vxpose.xlu0.b32.cont [11/16] 0.0, 128
        %1248 = vxpose.xlu0.b32.cont [12/16] 0.0, 128
        %1249 = vxpose.xlu0.b32.cont [13/16] 0.0, 128
        %1250 = vxpose.xlu0.b32.cont [14/16] 0.0, 128
        %1251 = vxpose.xlu0.b32.cont [15/16] 0.0, 128
        %1252 = vxpose.xlu0.b32.end [16/16] 0.0, 128
        %v1253 = vpop.trf.xlu0
        %v1254 = vpop.trf.xlu0
        %v1255 = vpop.trf.xlu0
        %v1256 = vpop.trf.xlu0
        %v1257 = vpop.trf.xlu0
        %v1258 = vpop.trf.xlu0
        %v1259 = vpop.trf.xlu0
        %v1260 = vpop.trf.xlu0
        %v1261 = vpop.trf.xlu0
        %v1262 = vpop.trf.xlu0
        %v1263 = vpop.trf.xlu0
        %v1264 = vpop.trf.xlu0
        %v1265 = vpop.trf.xlu0
        %v1266 = vpop.trf.xlu0
        %v1267 = vpop.trf.xlu0
        %v1268 = vpop.trf.xlu0
        %v1269 = vsel %vm465, %v1253, 0.0
        %1270 = vadd.xlane.f32.xlu0 %v1269
        %v1271 = vpop.xlane.xlu0 %1270
        %v1272 = vrcp.pop 32.0
        %v1273 = vmul.f32 %v1271, %v1272
        %v1274 = vsub.f32 %v1253, %v1273
        %v1275 = vmul.f32 %v1274, %v1274
        %v1276 = vsel %vm465, %v1275, 0.0
        %1277 = vadd.xlane.f32.xlu0 %v1276
        %v1278 = vpop.xlane.xlu0 %1277
        %v1279 = vmul.f32 %v1278, %v1272
        %v1280 = vadd.f32 %v1279, 1e-12
        %v1281 = vrsqrt.pop %v1280
        %v1282 = vmul.f32 %v1274, %v1281
        %v1283 = vld [vmem:[%s6] sm:$0x1]
        %v1285 = vlaneseq
        %v1286 = vshrl.u32 %v1285, 7
        %v1287 = vsub.s32 0, %v1286
        %v1288 = vrot.slane %v1283, %v1287
        %v1290 = vmul.f32 %v1282, %v1288
        %v1291 = vld [vmem:[%s7] sm:$0x1]
        %v1293 = vlaneseq
        %v1294 = vshrl.u32 %v1293, 7
        %v1295 = vsub.s32 0, %v1294
        %v1296 = vrot.slane %v1291, %v1295
        %v1298 = vadd.f32 %v1290, %v1296
        %1299 = vst.msk [vmem:[%s307] sm:$0xff] %vm465, %v1298
        %s1300 = sand.u32 %s208, 1
        %s1301 = scalar_lea.sflag [#allocation3], %s1300
        %s1302 = sand.u32 %s208, 1
        %s1303 = smul.addr %s1302, 8
        %s1304 = scalar_lea.vmem [#allocation2], %s1303
        // Predicated region
        $region53: #{tpu_custom_call.1} parent=51 // pred_check
          %p1305 = pneg %p218
        $region54: #{tpu_custom_call.1} parent=51 // pred_check_branch
          %1307 = sbr.rel (%p1305) target = $region56
        $region55: #{tpu_custom_call.1} parent=51 // pred_region
          %s1309 = ssub.s32 128, 128
          %1310 = vsyncadd %s1301, %s1309
          %s1311 = smul.addr %s22, 128
          %s1312 = scalar_lea.hbm %s8, %s1311
          %s1314 = sshll.u32 %s1304, 4
          %s1315 = int_to_ptr.vmem [resolvable:$true] %s1314
          %1317 = dma.vmem_to_hbm [thread:$0]  %s1315, 128, %s1312, %s1301
        $region56: #{tpu_custom_call.1} parent=51 // pred_fallthru
          _
      $region52: #{tpu_custom_call.1} parent=5 // pred_fallthru
        _
      %p1318 = scmp.le.s32.totalorder 2, %s17
      // Predicated region
      $region57: #{tpu_custom_call.1} parent=5 // pred_check
        %p1319 = pneg %p1318
      $region58: #{tpu_custom_call.1} parent=5 // pred_check_branch
        %1321 = sbr.rel (%p1319) target = $region60
      $region59: #{tpu_custom_call.1} parent=5 // pred_region
        %s1322 = ssub.s32 %s17, 2
        // Predicated region
        $region61: #{tpu_custom_call.1} parent=59 // pred_check
          %p1323 = pneg %p224
        $region62: #{tpu_custom_call.1} parent=59 // pred_check_branch
          %1325 = sbr.rel (%p1323) target = $region64
        $region63: #{tpu_custom_call.1} parent=59 // pred_region
          %s1326 = sand.u32 %s209, 1
          %s1327 = scalar_lea.sflag [#allocation3], %s1326
          %s1328 = sand.u32 %s209, 1
          %s1329 = smul.addr %s1328, 8
          %s1330 = scalar_lea.vmem [#allocation2], %s1329
          %1331 = dma.done %s1327, 128
        $region64: #{tpu_custom_call.1} parent=59 // pred_fallthru
          _
      $region60: #{tpu_custom_call.1} parent=5 // pred_fallthru
        _
    $region6: #{tpu_custom_call.1} parent=1 // loop_footer
      %s21 = sadd.s32 1, %s17
    $region7: #{tpu_custom_call.1} parent=1 // loop_footer_branch
      %16 = sbr.rel target = $region3
    $region8: #{tpu_custom_call.1} parent=1 // loop_exit
      _
    %1332 = vsyncpa [#allocation3], 1
    %s1333 = scalar_lea.sflag [#allocation3], 1
    %1334 = vsyncpa %s1333, 1

</llo_original>
